<compile_context>
chip_gen: v7x
topology: tpu7x:2x2x1
jax: 0.10.0
libtpu: 0.0.40
codegen_flags: <defaults>
</compile_context>

<pallas_src>
import functools

import jax
import jax.numpy as jnp
from jax.experimental import pallas as pl
from jax.experimental.pallas import tpu as pltpu


# ----------------------------------------------------------------------------
# Config
# ----------------------------------------------------------------------------
class Config:
    vocab = 50
    vocab_pad = 64          # word rows in the packed embedding table
    max_pos = 64
    type_vocab = 1
    hidden = 32
    heads = 4
    head_dim = 8            # hidden // heads
    intermediate = 64
    layers = 2
    num_labels = 9
    pad_idx = 1             # RoBERTa padding_idx (positions start at pad_idx + 1)
    label_pad = 128         # lane-dense classifier output width


# ----------------------------------------------------------------------------
# Fused Pallas kernel: the whole batch / whole model in one invocation
# ----------------------------------------------------------------------------
def _fused_bert_kernel(ids_ref, pos_ref, bias_ref, tab_ref,
                       wh_ref, wi2_ref, headw_ref, vecl_ref, vecg_ref,
                       out_ref, *, layers, heads, head_dim, inter, eps):
    H = heads * head_dim
    I = inter
    bf16 = jnp.bfloat16
    f32 = jnp.float32

    def ln(x, g, b):                            # f32 vector math (v5e-safe)
        mu = jnp.mean(x, axis=-1, keepdims=True)
        var = jnp.mean(jnp.square(x - mu), axis=-1, keepdims=True)
        return (x - mu) * jax.lax.rsqrt(var + eps) * g + b

    def mm(a, w):                               # bf16 MXU operands, f32 accumulation
        return jax.lax.dot_general(
            a.astype(bf16), w.astype(bf16),
            dimension_numbers=(((a.ndim - 1,), (0,)), ((), ())),
            preferred_element_type=f32)

    # ---- fused embedding lookup: two-hot rows x packed (word || pos) table ----
    rows = tab_ref.shape[0]                                    # vocab_pad + max_pos
    n_tok = ids_ref.shape[0]                                   # B*S
    lane = jax.lax.broadcasted_iota(jnp.int32, (n_tok, rows), 1)
    twohot = (jnp.where(lane == ids_ref[...], 1.0, 0.0)
              + jnp.where(lane == pos_ref[...], 1.0, 0.0))     # [BS, rows] f32
    x = mm(twohot, tab_ref[...])                               # [BS, H] f32
    vg = vecg_ref[...]                                         # [8, 128] f32 globals
    x = x + vg[4:5, :H]                                        # token-type-0 embedding
    h = ln(x, vg[0:1, :H], vg[1:2, :H])                        # embeddings LayerNorm

    # attention bias (block-diag batch isolation + key padding), hoisted once
    bias = bias_ref[...]                                       # [BS, BS] f32

    # ---- transformer layers (static unroll) ----
    for l in range(layers):
        wl = wh_ref[l]                                         # [H, 192] bf16
        vl = vecl_ref[l]                                       # [8, 3H]  f32

        # fused QKV projection; Q columns/bias are pre-scaled by 1/sqrt(head_dim)
        qkv = mm(h, wl[:, 0:3 * H]) + vl[0:1, 0:3 * H]         # [BS, 3H]

        ctx_heads = []
        for hd in range(heads):                                # static lane slices: free
            o = hd * head_dim
            qh = qkv[:, o:o + head_dim]
            kh = qkv[:, H + o:H + o + head_dim]
            vh = qkv[:, 2 * H + o:2 * H + o + head_dim]
            # contract last dims of q and k directly (no XLU transpose)
            s = jax.lax.dot_general(
                qh.astype(bf16), kh.astype(bf16),
                dimension_numbers=(((1,), (1,)), ((), ())),
                preferred_element_type=f32) + bias             # [BS, BS]
            s = s - jnp.max(s, axis=-1, keepdims=True)
            p = jnp.exp(s)
            p = p * pl.reciprocal(jnp.sum(p, axis=-1, keepdims=True), approx=True)
            ctx_heads.append(mm(p, vh))                        # [BS, Dh]
        ctx = jnp.concatenate(ctx_heads, axis=-1)              # [BS, H]

        attn = mm(ctx, wl[:, 3 * H:4 * H]) + vl[1:2, :H]
        h = ln(attn + h, vl[2:3, :H], vl[3:4, :H])

        it = mm(h, wl[:, 4 * H:4 * H + I]) + vl[4:5, :I]       # [BS, I]
        # tanh-approx GELU (runs on the EUP instead of a VALU erf polynomial)
        it = 0.5 * it * (1.0 + jnp.tanh(0.7978845608028654 *
                                        (it + 0.044715 * it * it * it)))
        ffn = mm(it, wi2_ref[l]) + vl[5:6, :H]
        h = ln(ffn + h, vl[6:7, :H], vl[7:8, :H])

    # ---- pooler + classifier over all rows (CLS rows selected in JAX) ----
    hw = headw_ref[...]                                        # [H, H+128] bf16
    feat = jnp.tanh(mm(h, hw[:, :H]) + vg[2:3, :H])            # [BS, H]
    logits = mm(feat, hw[:, H:]) + vg[3:4, :]                  # [BS, 128] lane-dense
    out_ref[...] = logits.astype(out_ref.dtype)


# ----------------------------------------------------------------------------
# Parameters (packed: 6 buffers total)
# ----------------------------------------------------------------------------
def init_params(key, cfg):
    H, I, L = cfg.hidden, cfg.intermediate, cfg.layers
    Dh, P = cfg.head_dim, cfg.label_pad
    bf16 = jnp.bfloat16
    ks = iter(jax.random.split(key, 20))

    def n(k, shape):
        return 0.02 * jax.random.normal(k, shape, jnp.float32)

    # packed embedding table: rows [0, vocab_pad) = word, [vocab_pad, +max_pos) = pos
    tab = jnp.zeros((cfg.vocab_pad + cfg.max_pos, H), jnp.float32)
    tab = tab.at[:cfg.vocab].set(n(next(ks), (cfg.vocab, H)))
    tab = tab.at[cfg.vocab_pad:cfg.vocab_pad + cfg.max_pos].set(
        n(next(ks), (cfg.max_pos, H)))
    type_row = n(next(ks), (H,))

    scale = 1.0 / (Dh ** 0.5)
    wq = n(next(ks), (L, H, H)) * scale          # fold 1/sqrt(head_dim) into Q
    wk = n(next(ks), (L, H, H))
    wv = n(next(ks), (L, H, H))
    wo = n(next(ks), (L, H, H))
    wi = n(next(ks), (L, H, I))
    wo2 = n(next(ks), (L, I, H))
    # lane-packed H-row weights: [0:3H)=Wqkv, [3H:4H)=Wo, [4H:4H+I)=Wi
    w_h = jnp.concatenate([wq, wk, wv, wo, wi], axis=-1).astype(bf16)   # [L, H, 192]
    w_i = wo2.astype(bf16)                                              # [L, I, H]

    # per-layer small f32 params, packed rows:
    # 0:bqkv(3H) 1:bo(H) 2:ln1_g 3:ln1_b 4:bi(I) 5:bo2(H) 6:ln2_g 7:ln2_b
    vec_l = jnp.zeros((L, 8, 3 * H), jnp.float32)
    bq = n(next(ks), (L, H)) * scale             # Q bias pre-scaled as well
    bk = n(next(ks), (L, H))
    bv = n(next(ks), (L, H))
    vec_l = vec_l.at[:, 0, :].set(jnp.concatenate([bq, bk, bv], axis=-1))
    vec_l = vec_l.at[:, 1, :H].set(n(next(ks), (L, H)))
    vec_l = vec_l.at[:, 2, :H].set(1.0)
    vec_l = vec_l.at[:, 4, :I].set(n(next(ks), (L, I)))
    vec_l = vec_l.at[:, 5, :H].set(n(next(ks), (L, H)))
    vec_l = vec_l.at[:, 6, :H].set(1.0)

    # globals: rows 0:emb_ln_g 1:emb_ln_b 2:pool_b 3:fc_b(128) 4:type_emb
    vec_g = jnp.zeros((8, P), jnp.float32)
    vec_g = vec_g.at[0, :H].set(1.0)
    vec_g = vec_g.at[2, :H].set(n(next(ks), (H,)))
    vec_g = vec_g.at[3, :cfg.num_labels].set(n(next(ks), (cfg.num_labels,)))
    vec_g = vec_g.at[4, :H].set(type_row)

    # pooler + classifier weights, lane-packed: [:, :H]=pool_w, [:, H:H+9]=fc_w
    head_w = jnp.zeros((H, H + P), jnp.float32)
    head_w = head_w.at[:, :H].set(n(next(ks), (H, H)))
    head_w = head_w.at[:, H:H + cfg.num_labels].set(n(next(ks), (H, cfg.num_labels)))
    head_w = head_w.astype(bf16)

    return dict(emb_table=tab.astype(bf16), w_h=w_h, w_i=w_i,
                vec_l=vec_l, vec_g=vec_g, head_w=head_w)


# ----------------------------------------------------------------------------
# Forward pass
# ----------------------------------------------------------------------------
def bert_class_forward(params, ids, mask, token_type_ids, cfg):
    # type_vocab_size == 1 -> the only valid token_type id is 0; its embedding row
    # is added as a constant inside the kernel.
    del token_type_ids
    B, S = ids.shape
    BS = B * S

    # RoBERTa position ids (tiny int ops; the [B,S,H] gathers moved in-kernel)
    pos_ids = jnp.cumsum(mask, axis=1) * mask + cfg.pad_idx
    ids2 = ids.reshape(BS, 1).astype(jnp.int32)
    pos2 = (pos_ids.reshape(BS, 1) + cfg.vocab_pad).astype(jnp.int32)

    # block-diagonal (per-batch isolation) + key-padding additive bias, built once
    bid = jnp.arange(BS, dtype=jnp.int32) // S
    same = (bid[:, None] == bid[None, :]).astype(jnp.float32)
    keymask = mask.astype(jnp.float32).reshape(1, BS)
    attn_bias = (same - 1.0) * 2e9 + (keymask - 1.0) * 1e9       # [BS, BS] f32

    vmem_specs = [pl.BlockSpec(memory_space=pltpu.MemorySpace.VMEM)
                  for _ in range(9)]

    out = pl.pallas_call(
        functools.partial(
            _fused_bert_kernel,
            layers=cfg.layers, heads=cfg.heads, head_dim=cfg.head_dim,
            inter=cfg.intermediate, eps=1e-5),
        out_shape=jax.ShapeDtypeStruct((BS, cfg.label_pad), jnp.float32),
        in_specs=vmem_specs,
        out_specs=pl.BlockSpec(memory_space=pltpu.MemorySpace.VMEM),
    )(ids2, pos2, attn_bias, params["emb_table"], params["w_h"], params["w_i"],
      params["head_w"], params["vec_l"], params["vec_g"])

    # CLS row of each sequence, slice the 9 real labels off the 128-lane output
    return out.reshape(B, S, cfg.label_pad)[:, 0, :cfg.num_labels]


# ----------------------------------------------------------------------------
if __name__ == "__main__":
    cfg = Config()
    B, S = 2, 8

    key = jax.random.PRNGKey(0)
    k_params, k_ids = jax.random.split(key)

    params = init_params(k_params, cfg)
    ids = jax.random.randint(k_ids, (B, S), 2, cfg.vocab, dtype=jnp.int32)
    mask = jnp.ones((B, S), jnp.int32)
    token_type_ids = jnp.zeros((B, S), jnp.int32)

    fwd = jax.jit(functools.partial(bert_class_forward, cfg=cfg))
    logits = fwd(params, ids, mask, token_type_ids)
    jax.block_until_ready(logits)

    assert logits.shape == (B, cfg.num_labels)
    assert bool(jnp.all(jnp.isfinite(logits)))
    print("KERNEL_OK")
</pallas_src>

<mosaic_0001>
module attributes {stable_mosaic.version = 11 : i64} {
  func.func @_fused_bert_kernel(%arg0: memref<16x1xi32, #tpu.memory_space<vmem>>, %arg1: memref<16x1xi32, #tpu.memory_space<vmem>>, %arg2: memref<16x16xf32, #tpu.memory_space<vmem>>, %arg3: memref<128x32xbf16, #tpu.memory_space<vmem>>, %arg4: memref<2x32x192xbf16, #tpu.memory_space<vmem>>, %arg5: memref<2x64x32xbf16, #tpu.memory_space<vmem>>, %arg6: memref<32x160xbf16, #tpu.memory_space<vmem>>, %arg7: memref<2x8x96xf32, #tpu.memory_space<vmem>>, %arg8: memref<8x128xf32, #tpu.memory_space<vmem>>, %arg9: memref<16x128xf32, #tpu.memory_space<vmem>>) attributes {dimension_semantics = [], scalar_prefetch = 0 : i64, scratch_operands = 0 : i64, tpu.core_type = #tpu.core_type<tc>} {
    %0 = tpu.iota {dimensions = array<i32: 1>} : vector<16x128xi32>
    %c0 = arith.constant 0 : index
    %c0_0 = arith.constant 0 : index
    %1 = vector.load %arg0[%c0, %c0_0] : memref<16x1xi32, #tpu.memory_space<vmem>>, vector<16x1xi32>
    %2 = vector.broadcast %1 : vector<16x1xi32> to vector<16x128xi32>
    %3 = arith.cmpi eq, %0, %2 : vector<16x128xi32>
    %cst = arith.constant 1.000000e+00 : f32
    %cst_1 = arith.constant 0.000000e+00 : f32
    %4 = vector.broadcast %cst : f32 to vector<16x128xf32>
    %5 = vector.broadcast %cst_1 : f32 to vector<16x128xf32>
    %6 = arith.select %3, %4, %5 : vector<16x128xi1>, vector<16x128xf32>
    %c0_2 = arith.constant 0 : index
    %c0_3 = arith.constant 0 : index
    %7 = vector.load %arg1[%c0_2, %c0_3] : memref<16x1xi32, #tpu.memory_space<vmem>>, vector<16x1xi32>
    %8 = vector.broadcast %7 : vector<16x1xi32> to vector<16x128xi32>
    %9 = arith.cmpi eq, %0, %8 : vector<16x128xi32>
    %cst_4 = arith.constant 1.000000e+00 : f32
    %cst_5 = arith.constant 0.000000e+00 : f32
    %10 = vector.broadcast %cst_4 : f32 to vector<16x128xf32>
    %11 = vector.broadcast %cst_5 : f32 to vector<16x128xf32>
    %12 = arith.select %9, %10, %11 : vector<16x128xi1>, vector<16x128xf32>
    %13 = arith.addf %6, %12 : vector<16x128xf32>
    %c0_6 = arith.constant 0 : index
    %c0_7 = arith.constant 0 : index
    %14 = vector.load %arg3[%c0_6, %c0_7] : memref<128x32xbf16, #tpu.memory_space<vmem>>, vector<128x32xbf16>
    %15 = arith.truncf %13 : vector<16x128xf32> to vector<16x128xbf16>
    %cst_8 = arith.constant dense<0.000000e+00> : vector<16x32xf32>
    %16 = tpu.matmul %15, %14, %cst_8 {dimension_numbers = #tpu.dot_dimension_numbers<[1], [0], [0], [1], [0, 0, 1, 1], [], []>} : vector<16x128xbf16>, vector<128x32xbf16>, vector<16x32xf32> -> vector<16x32xf32>
    %c0_9 = arith.constant 0 : index
    %c0_10 = arith.constant 0 : index
    %17 = vector.load %arg8[%c0_9, %c0_10] : memref<8x128xf32, #tpu.memory_space<vmem>>, vector<8x128xf32>
    %18 = vector.extract_strided_slice %17 {offsets = [4, 0], sizes = [1, 32], strides = [1, 1]} : vector<8x128xf32> to vector<1x32xf32>
    %19 = vector.broadcast %18 : vector<1x32xf32> to vector<16x32xf32>
    %20 = arith.addf %16, %19 : vector<16x32xf32>
    %21 = vector.extract_strided_slice %17 {offsets = [0, 0], sizes = [1, 32], strides = [1, 1]} : vector<8x128xf32> to vector<1x32xf32>
    %22 = vector.extract_strided_slice %17 {offsets = [1, 0], sizes = [1, 32], strides = [1, 1]} : vector<8x128xf32> to vector<1x32xf32>
    %cst_11 = arith.constant dense<0.000000e+00> : vector<16xf32>
    %23 = vector.multi_reduction <add>, %20, %cst_11 [1] : vector<16x32xf32> to vector<16xf32>
    %24 = vector.shape_cast %23 : vector<16xf32> to vector<16x1xf32>
    %cst_12 = arith.constant 3.200000e+01 : f32
    %25 = vector.broadcast %cst_12 : f32 to vector<16x1xf32>
    %26 = arith.divf %24, %25 : vector<16x1xf32>
    %27 = vector.broadcast %26 : vector<16x1xf32> to vector<16x32xf32>
    %28 = arith.subf %20, %27 : vector<16x32xf32>
    %29 = arith.mulf %28, %28 : vector<16x32xf32>
    %cst_13 = arith.constant dense<0.000000e+00> : vector<16xf32>
    %30 = vector.multi_reduction <add>, %29, %cst_13 [1] : vector<16x32xf32> to vector<16xf32>
    %31 = vector.shape_cast %30 : vector<16xf32> to vector<16x1xf32>
    %cst_14 = arith.constant 3.200000e+01 : f32
    %32 = vector.broadcast %cst_14 : f32 to vector<16x1xf32>
    %33 = arith.divf %31, %32 : vector<16x1xf32>
    %34 = vector.broadcast %26 : vector<16x1xf32> to vector<16x32xf32>
    %35 = arith.subf %20, %34 : vector<16x32xf32>
    %cst_15 = arith.constant 9.99999974E-6 : f32
    %36 = vector.broadcast %cst_15 : f32 to vector<16x1xf32>
    %37 = arith.addf %33, %36 : vector<16x1xf32>
    %38 = math.rsqrt %37 : vector<16x1xf32>
    %39 = vector.broadcast %38 : vector<16x1xf32> to vector<16x32xf32>
    %40 = arith.mulf %35, %39 : vector<16x32xf32>
    %41 = vector.broadcast %21 : vector<1x32xf32> to vector<16x32xf32>
    %42 = arith.mulf %40, %41 : vector<16x32xf32>
    %43 = vector.broadcast %22 : vector<1x32xf32> to vector<16x32xf32>
    %44 = arith.addf %42, %43 : vector<16x32xf32>
    %c0_16 = arith.constant 0 : index
    %c0_17 = arith.constant 0 : index
    %45 = vector.load %arg2[%c0_16, %c0_17] : memref<16x16xf32, #tpu.memory_space<vmem>>, vector<16x16xf32>
    %c0_18 = arith.constant 0 : index
    %c0_19 = arith.constant 0 : index
    %c0_20 = arith.constant 0 : index
    %46 = vector.load %arg4[%c0_18, %c0_19, %c0_20] : memref<2x32x192xbf16, #tpu.memory_space<vmem>>, vector<1x32x192xbf16>
    %47 = vector.shape_cast %46 : vector<1x32x192xbf16> to vector<32x192xbf16>
    %c0_21 = arith.constant 0 : index
    %c0_22 = arith.constant 0 : index
    %c0_23 = arith.constant 0 : index
    %48 = vector.load %arg7[%c0_21, %c0_22, %c0_23] : memref<2x8x96xf32, #tpu.memory_space<vmem>>, vector<1x8x96xf32>
    %49 = vector.shape_cast %48 : vector<1x8x96xf32> to vector<8x96xf32>
    %50 = vector.extract_strided_slice %47 {offsets = [0, 0], sizes = [32, 96], strides = [1, 1]} : vector<32x192xbf16> to vector<32x96xbf16>
    %51 = arith.truncf %44 : vector<16x32xf32> to vector<16x32xbf16>
    %cst_24 = arith.constant dense<0.000000e+00> : vector<16x96xf32>
    %52 = tpu.matmul %51, %50, %cst_24 {dimension_numbers = #tpu.dot_dimension_numbers<[1], [0], [0], [1], [0, 0, 1, 1], [], []>} : vector<16x32xbf16>, vector<32x96xbf16>, vector<16x96xf32> -> vector<16x96xf32>
    %53 = vector.extract_strided_slice %49 {offsets = [0, 0], sizes = [1, 96], strides = [1, 1]} : vector<8x96xf32> to vector<1x96xf32>
    %54 = vector.broadcast %53 : vector<1x96xf32> to vector<16x96xf32>
    %55 = arith.addf %52, %54 : vector<16x96xf32>
    %56 = vector.extract_strided_slice %55 {offsets = [0, 0], sizes = [16, 8], strides = [1, 1]} : vector<16x96xf32> to vector<16x8xf32>
    %57 = vector.extract_strided_slice %55 {offsets = [0, 32], sizes = [16, 8], strides = [1, 1]} : vector<16x96xf32> to vector<16x8xf32>
    %58 = vector.extract_strided_slice %55 {offsets = [0, 64], sizes = [16, 8], strides = [1, 1]} : vector<16x96xf32> to vector<16x8xf32>
    %59 = arith.truncf %56 : vector<16x8xf32> to vector<16x8xbf16>
    %60 = arith.truncf %57 : vector<16x8xf32> to vector<16x8xbf16>
    %cst_25 = arith.constant dense<0.000000e+00> : vector<16x16xf32>
    %61 = tpu.matmul %59, %60, %cst_25 {dimension_numbers = #tpu.dot_dimension_numbers<[1], [1], [0], [0], [0, 0, 1, 0], [], []>} : vector<16x8xbf16>, vector<16x8xbf16>, vector<16x16xf32> -> vector<16x16xf32>
    %62 = arith.addf %61, %45 : vector<16x16xf32>
    %cst_26 = arith.constant dense<0xFF800000> : vector<16xf32>
    %63 = vector.multi_reduction <maximumf>, %62, %cst_26 [1] : vector<16x16xf32> to vector<16xf32>
    %64 = vector.shape_cast %63 : vector<16xf32> to vector<16x1xf32>
    %65 = vector.broadcast %64 : vector<16x1xf32> to vector<16x16xf32>
    %66 = arith.subf %62, %65 : vector<16x16xf32>
    %67 = math.exp %66 : vector<16x16xf32>
    %cst_27 = arith.constant dense<0.000000e+00> : vector<16xf32>
    %68 = vector.multi_reduction <add>, %67, %cst_27 [1] : vector<16x16xf32> to vector<16xf32>
    %69 = vector.shape_cast %68 : vector<16xf32> to vector<16x1xf32>
    %70 = tpu.reciprocal %69 {approx = true} : vector<16x1xf32> -> vector<16x1xf32>
    %71 = vector.broadcast %70 : vector<16x1xf32> to vector<16x16xf32>
    %72 = arith.mulf %67, %71 : vector<16x16xf32>
    %73 = arith.truncf %72 : vector<16x16xf32> to vector<16x16xbf16>
    %74 = arith.truncf %58 : vector<16x8xf32> to vector<16x8xbf16>
    %cst_28 = arith.constant dense<0.000000e+00> : vector<16x8xf32>
    %75 = tpu.matmul %73, %74, %cst_28 {dimension_numbers = #tpu.dot_dimension_numbers<[1], [0], [0], [1], [0, 0, 1, 1], [], []>} : vector<16x16xbf16>, vector<16x8xbf16>, vector<16x8xf32> -> vector<16x8xf32>
    %76 = vector.extract_strided_slice %55 {offsets = [0, 8], sizes = [16, 8], strides = [1, 1]} : vector<16x96xf32> to vector<16x8xf32>
    %77 = vector.extract_strided_slice %55 {offsets = [0, 40], sizes = [16, 8], strides = [1, 1]} : vector<16x96xf32> to vector<16x8xf32>
    %78 = vector.extract_strided_slice %55 {offsets = [0, 72], sizes = [16, 8], strides = [1, 1]} : vector<16x96xf32> to vector<16x8xf32>
    %79 = arith.truncf %76 : vector<16x8xf32> to vector<16x8xbf16>
    %80 = arith.truncf %77 : vector<16x8xf32> to vector<16x8xbf16>
    %cst_29 = arith.constant dense<0.000000e+00> : vector<16x16xf32>
    %81 = tpu.matmul %79, %80, %cst_29 {dimension_numbers = #tpu.dot_dimension_numbers<[1], [1], [0], [0], [0, 0, 1, 0], [], []>} : vector<16x8xbf16>, vector<16x8xbf16>, vector<16x16xf32> -> vector<16x16xf32>
    %82 = arith.addf %81, %45 : vector<16x16xf32>
    %cst_30 = arith.constant dense<0xFF800000> : vector<16xf32>
    %83 = vector.multi_reduction <maximumf>, %82, %cst_30 [1] : vector<16x16xf32> to vector<16xf32>
    %84 = vector.shape_cast %83 : vector<16xf32> to vector<16x1xf32>
    %85 = vector.broadcast %84 : vector<16x1xf32> to vector<16x16xf32>
    %86 = arith.subf %82, %85 : vector<16x16xf32>
    %87 = math.exp %86 : vector<16x16xf32>
    %cst_31 = arith.constant dense<0.000000e+00> : vector<16xf32>
    %88 = vector.multi_reduction <add>, %87, %cst_31 [1] : vector<16x16xf32> to vector<16xf32>
    %89 = vector.shape_cast %88 : vector<16xf32> to vector<16x1xf32>
    %90 = tpu.reciprocal %89 {approx = true} : vector<16x1xf32> -> vector<16x1xf32>
    %91 = vector.broadcast %90 : vector<16x1xf32> to vector<16x16xf32>
    %92 = arith.mulf %87, %91 : vector<16x16xf32>
    %93 = arith.truncf %92 : vector<16x16xf32> to vector<16x16xbf16>
    %94 = arith.truncf %78 : vector<16x8xf32> to vector<16x8xbf16>
    %cst_32 = arith.constant dense<0.000000e+00> : vector<16x8xf32>
    %95 = tpu.matmul %93, %94, %cst_32 {dimension_numbers = #tpu.dot_dimension_numbers<[1], [0], [0], [1], [0, 0, 1, 1], [], []>} : vector<16x16xbf16>, vector<16x8xbf16>, vector<16x8xf32> -> vector<16x8xf32>
    %96 = vector.extract_strided_slice %55 {offsets = [0, 16], sizes = [16, 8], strides = [1, 1]} : vector<16x96xf32> to vector<16x8xf32>
    %97 = vector.extract_strided_slice %55 {offsets = [0, 48], sizes = [16, 8], strides = [1, 1]} : vector<16x96xf32> to vector<16x8xf32>
    %98 = vector.extract_strided_slice %55 {offsets = [0, 80], sizes = [16, 8], strides = [1, 1]} : vector<16x96xf32> to vector<16x8xf32>
    %99 = arith.truncf %96 : vector<16x8xf32> to vector<16x8xbf16>
    %100 = arith.truncf %97 : vector<16x8xf32> to vector<16x8xbf16>
    %cst_33 = arith.constant dense<0.000000e+00> : vector<16x16xf32>
    %101 = tpu.matmul %99, %100, %cst_33 {dimension_numbers = #tpu.dot_dimension_numbers<[1], [1], [0], [0], [0, 0, 1, 0], [], []>} : vector<16x8xbf16>, vector<16x8xbf16>, vector<16x16xf32> -> vector<16x16xf32>
    %102 = arith.addf %101, %45 : vector<16x16xf32>
    %cst_34 = arith.constant dense<0xFF800000> : vector<16xf32>
    %103 = vector.multi_reduction <maximumf>, %102, %cst_34 [1] : vector<16x16xf32> to vector<16xf32>
    %104 = vector.shape_cast %103 : vector<16xf32> to vector<16x1xf32>
    %105 = vector.broadcast %104 : vector<16x1xf32> to vector<16x16xf32>
    %106 = arith.subf %102, %105 : vector<16x16xf32>
    %107 = math.exp %106 : vector<16x16xf32>
    %cst_35 = arith.constant dense<0.000000e+00> : vector<16xf32>
    %108 = vector.multi_reduction <add>, %107, %cst_35 [1] : vector<16x16xf32> to vector<16xf32>
    %109 = vector.shape_cast %108 : vector<16xf32> to vector<16x1xf32>
    %110 = tpu.reciprocal %109 {approx = true} : vector<16x1xf32> -> vector<16x1xf32>
    %111 = vector.broadcast %110 : vector<16x1xf32> to vector<16x16xf32>
    %112 = arith.mulf %107, %111 : vector<16x16xf32>
    %113 = arith.truncf %112 : vector<16x16xf32> to vector<16x16xbf16>
    %114 = arith.truncf %98 : vector<16x8xf32> to vector<16x8xbf16>
    %cst_36 = arith.constant dense<0.000000e+00> : vector<16x8xf32>
    %115 = tpu.matmul %113, %114, %cst_36 {dimension_numbers = #tpu.dot_dimension_numbers<[1], [0], [0], [1], [0, 0, 1, 1], [], []>} : vector<16x16xbf16>, vector<16x8xbf16>, vector<16x8xf32> -> vector<16x8xf32>
    %116 = vector.extract_strided_slice %55 {offsets = [0, 24], sizes = [16, 8], strides = [1, 1]} : vector<16x96xf32> to vector<16x8xf32>
    %117 = vector.extract_strided_slice %55 {offsets = [0, 56], sizes = [16, 8], strides = [1, 1]} : vector<16x96xf32> to vector<16x8xf32>
    %118 = vector.extract_strided_slice %55 {offsets = [0, 88], sizes = [16, 8], strides = [1, 1]} : vector<16x96xf32> to vector<16x8xf32>
    %119 = arith.truncf %116 : vector<16x8xf32> to vector<16x8xbf16>
    %120 = arith.truncf %117 : vector<16x8xf32> to vector<16x8xbf16>
    %cst_37 = arith.constant dense<0.000000e+00> : vector<16x16xf32>
    %121 = tpu.matmul %119, %120, %cst_37 {dimension_numbers = #tpu.dot_dimension_numbers<[1], [1], [0], [0], [0, 0, 1, 0], [], []>} : vector<16x8xbf16>, vector<16x8xbf16>, vector<16x16xf32> -> vector<16x16xf32>
    %122 = arith.addf %121, %45 : vector<16x16xf32>
    %cst_38 = arith.constant dense<0xFF800000> : vector<16xf32>
    %123 = vector.multi_reduction <maximumf>, %122, %cst_38 [1] : vector<16x16xf32> to vector<16xf32>
    %124 = vector.shape_cast %123 : vector<16xf32> to vector<16x1xf32>
    %125 = vector.broadcast %124 : vector<16x1xf32> to vector<16x16xf32>
    %126 = arith.subf %122, %125 : vector<16x16xf32>
    %127 = math.exp %126 : vector<16x16xf32>
    %cst_39 = arith.constant dense<0.000000e+00> : vector<16xf32>
    %128 = vector.multi_reduction <add>, %127, %cst_39 [1] : vector<16x16xf32> to vector<16xf32>
    %129 = vector.shape_cast %128 : vector<16xf32> to vector<16x1xf32>
    %130 = tpu.reciprocal %129 {approx = true} : vector<16x1xf32> -> vector<16x1xf32>
    %131 = vector.broadcast %130 : vector<16x1xf32> to vector<16x16xf32>
    %132 = arith.mulf %127, %131 : vector<16x16xf32>
    %133 = arith.truncf %132 : vector<16x16xf32> to vector<16x16xbf16>
    %134 = arith.truncf %118 : vector<16x8xf32> to vector<16x8xbf16>
    %cst_40 = arith.constant dense<0.000000e+00> : vector<16x8xf32>
    %135 = tpu.matmul %133, %134, %cst_40 {dimension_numbers = #tpu.dot_dimension_numbers<[1], [0], [0], [1], [0, 0, 1, 1], [], []>} : vector<16x16xbf16>, vector<16x8xbf16>, vector<16x8xf32> -> vector<16x8xf32>
    %136 = tpu.concatenate %75, %95, %115, %135 in 1 : vector<16x8xf32>, vector<16x8xf32>, vector<16x8xf32>, vector<16x8xf32> -> vector<16x32xf32>
    %137 = vector.extract_strided_slice %47 {offsets = [0, 96], sizes = [32, 32], strides = [1, 1]} : vector<32x192xbf16> to vector<32x32xbf16>
    %138 = arith.truncf %136 : vector<16x32xf32> to vector<16x32xbf16>
    %cst_41 = arith.constant dense<0.000000e+00> : vector<16x32xf32>
    %139 = tpu.matmul %138, %137, %cst_41 {dimension_numbers = #tpu.dot_dimension_numbers<[1], [0], [0], [1], [0, 0, 1, 1], [], []>} : vector<16x32xbf16>, vector<32x32xbf16>, vector<16x32xf32> -> vector<16x32xf32>
    %140 = vector.extract_strided_slice %49 {offsets = [1, 0], sizes = [1, 32], strides = [1, 1]} : vector<8x96xf32> to vector<1x32xf32>
    %141 = vector.broadcast %140 : vector<1x32xf32> to vector<16x32xf32>
    %142 = arith.addf %139, %141 : vector<16x32xf32>
    %143 = arith.addf %142, %44 : vector<16x32xf32>
    %144 = vector.extract_strided_slice %49 {offsets = [2, 0], sizes = [1, 32], strides = [1, 1]} : vector<8x96xf32> to vector<1x32xf32>
    %145 = vector.extract_strided_slice %49 {offsets = [3, 0], sizes = [1, 32], strides = [1, 1]} : vector<8x96xf32> to vector<1x32xf32>
    %cst_42 = arith.constant dense<0.000000e+00> : vector<16xf32>
    %146 = vector.multi_reduction <add>, %143, %cst_42 [1] : vector<16x32xf32> to vector<16xf32>
    %147 = vector.shape_cast %146 : vector<16xf32> to vector<16x1xf32>
    %cst_43 = arith.constant 3.200000e+01 : f32
    %148 = vector.broadcast %cst_43 : f32 to vector<16x1xf32>
    %149 = arith.divf %147, %148 : vector<16x1xf32>
    %150 = vector.broadcast %149 : vector<16x1xf32> to vector<16x32xf32>
    %151 = arith.subf %143, %150 : vector<16x32xf32>
    %152 = arith.mulf %151, %151 : vector<16x32xf32>
    %cst_44 = arith.constant dense<0.000000e+00> : vector<16xf32>
    %153 = vector.multi_reduction <add>, %152, %cst_44 [1] : vector<16x32xf32> to vector<16xf32>
    %154 = vector.shape_cast %153 : vector<16xf32> to vector<16x1xf32>
    %cst_45 = arith.constant 3.200000e+01 : f32
    %155 = vector.broadcast %cst_45 : f32 to vector<16x1xf32>
    %156 = arith.divf %154, %155 : vector<16x1xf32>
    %157 = vector.broadcast %149 : vector<16x1xf32> to vector<16x32xf32>
    %158 = arith.subf %143, %157 : vector<16x32xf32>
    %cst_46 = arith.constant 9.99999974E-6 : f32
    %159 = vector.broadcast %cst_46 : f32 to vector<16x1xf32>
    %160 = arith.addf %156, %159 : vector<16x1xf32>
    %161 = math.rsqrt %160 : vector<16x1xf32>
    %162 = vector.broadcast %161 : vector<16x1xf32> to vector<16x32xf32>
    %163 = arith.mulf %158, %162 : vector<16x32xf32>
    %164 = vector.broadcast %144 : vector<1x32xf32> to vector<16x32xf32>
    %165 = arith.mulf %163, %164 : vector<16x32xf32>
    %166 = vector.broadcast %145 : vector<1x32xf32> to vector<16x32xf32>
    %167 = arith.addf %165, %166 : vector<16x32xf32>
    %168 = vector.extract_strided_slice %47 {offsets = [0, 128], sizes = [32, 64], strides = [1, 1]} : vector<32x192xbf16> to vector<32x64xbf16>
    %169 = arith.truncf %167 : vector<16x32xf32> to vector<16x32xbf16>
    %cst_47 = arith.constant dense<0.000000e+00> : vector<16x64xf32>
    %170 = tpu.matmul %169, %168, %cst_47 {dimension_numbers = #tpu.dot_dimension_numbers<[1], [0], [0], [1], [0, 0, 1, 1], [], []>} : vector<16x32xbf16>, vector<32x64xbf16>, vector<16x64xf32> -> vector<16x64xf32>
    %171 = vector.extract_strided_slice %49 {offsets = [4, 0], sizes = [1, 64], strides = [1, 1]} : vector<8x96xf32> to vector<1x64xf32>
    %172 = vector.broadcast %171 : vector<1x64xf32> to vector<16x64xf32>
    %173 = arith.addf %170, %172 : vector<16x64xf32>
    %cst_48 = arith.constant 5.000000e-01 : f32
    %174 = vector.broadcast %cst_48 : f32 to vector<16x64xf32>
    %175 = arith.mulf %174, %173 : vector<16x64xf32>
    %cst_49 = arith.constant 4.471500e-02 : f32
    %176 = vector.broadcast %cst_49 : f32 to vector<16x64xf32>
    %177 = arith.mulf %176, %173 : vector<16x64xf32>
    %178 = arith.mulf %177, %173 : vector<16x64xf32>
    %179 = arith.mulf %178, %173 : vector<16x64xf32>
    %180 = arith.addf %173, %179 : vector<16x64xf32>
    %cst_50 = arith.constant 0.797884583 : f32
    %181 = vector.broadcast %cst_50 : f32 to vector<16x64xf32>
    %182 = arith.mulf %181, %180 : vector<16x64xf32>
    %183 = math.tanh %182 : vector<16x64xf32>
    %cst_51 = arith.constant 1.000000e+00 : f32
    %184 = vector.broadcast %cst_51 : f32 to vector<16x64xf32>
    %185 = arith.addf %184, %183 : vector<16x64xf32>
    %186 = arith.mulf %175, %185 : vector<16x64xf32>
    %c0_52 = arith.constant 0 : index
    %c0_53 = arith.constant 0 : index
    %c0_54 = arith.constant 0 : index
    %187 = vector.load %arg5[%c0_52, %c0_53, %c0_54] : memref<2x64x32xbf16, #tpu.memory_space<vmem>>, vector<1x64x32xbf16>
    %188 = vector.shape_cast %187 : vector<1x64x32xbf16> to vector<64x32xbf16>
    %189 = arith.truncf %186 : vector<16x64xf32> to vector<16x64xbf16>
    %cst_55 = arith.constant dense<0.000000e+00> : vector<16x32xf32>
    %190 = tpu.matmul %189, %188, %cst_55 {dimension_numbers = #tpu.dot_dimension_numbers<[1], [0], [0], [1], [0, 0, 1, 1], [], []>} : vector<16x64xbf16>, vector<64x32xbf16>, vector<16x32xf32> -> vector<16x32xf32>
    %191 = vector.extract_strided_slice %49 {offsets = [5, 0], sizes = [1, 32], strides = [1, 1]} : vector<8x96xf32> to vector<1x32xf32>
    %192 = vector.broadcast %191 : vector<1x32xf32> to vector<16x32xf32>
    %193 = arith.addf %190, %192 : vector<16x32xf32>
    %194 = arith.addf %193, %167 : vector<16x32xf32>
    %195 = vector.extract_strided_slice %49 {offsets = [6, 0], sizes = [1, 32], strides = [1, 1]} : vector<8x96xf32> to vector<1x32xf32>
    %196 = vector.extract_strided_slice %49 {offsets = [7, 0], sizes = [1, 32], strides = [1, 1]} : vector<8x96xf32> to vector<1x32xf32>
    %cst_56 = arith.constant dense<0.000000e+00> : vector<16xf32>
    %197 = vector.multi_reduction <add>, %194, %cst_56 [1] : vector<16x32xf32> to vector<16xf32>
    %198 = vector.shape_cast %197 : vector<16xf32> to vector<16x1xf32>
    %cst_57 = arith.constant 3.200000e+01 : f32
    %199 = vector.broadcast %cst_57 : f32 to vector<16x1xf32>
    %200 = arith.divf %198, %199 : vector<16x1xf32>
    %201 = vector.broadcast %200 : vector<16x1xf32> to vector<16x32xf32>
    %202 = arith.subf %194, %201 : vector<16x32xf32>
    %203 = arith.mulf %202, %202 : vector<16x32xf32>
    %cst_58 = arith.constant dense<0.000000e+00> : vector<16xf32>
    %204 = vector.multi_reduction <add>, %203, %cst_58 [1] : vector<16x32xf32> to vector<16xf32>
    %205 = vector.shape_cast %204 : vector<16xf32> to vector<16x1xf32>
    %cst_59 = arith.constant 3.200000e+01 : f32
    %206 = vector.broadcast %cst_59 : f32 to vector<16x1xf32>
    %207 = arith.divf %205, %206 : vector<16x1xf32>
    %208 = vector.broadcast %200 : vector<16x1xf32> to vector<16x32xf32>
    %209 = arith.subf %194, %208 : vector<16x32xf32>
    %cst_60 = arith.constant 9.99999974E-6 : f32
    %210 = vector.broadcast %cst_60 : f32 to vector<16x1xf32>
    %211 = arith.addf %207, %210 : vector<16x1xf32>
    %212 = math.rsqrt %211 : vector<16x1xf32>
    %213 = vector.broadcast %212 : vector<16x1xf32> to vector<16x32xf32>
    %214 = arith.mulf %209, %213 : vector<16x32xf32>
    %215 = vector.broadcast %195 : vector<1x32xf32> to vector<16x32xf32>
    %216 = arith.mulf %214, %215 : vector<16x32xf32>
    %217 = vector.broadcast %196 : vector<1x32xf32> to vector<16x32xf32>
    %218 = arith.addf %216, %217 : vector<16x32xf32>
    %c1 = arith.constant 1 : index
    %c0_61 = arith.constant 0 : index
    %c0_62 = arith.constant 0 : index
    %219 = vector.load %arg4[%c1, %c0_61, %c0_62] : memref<2x32x192xbf16, #tpu.memory_space<vmem>>, vector<1x32x192xbf16>
    %220 = vector.shape_cast %219 : vector<1x32x192xbf16> to vector<32x192xbf16>
    %c1_63 = arith.constant 1 : index
    %c0_64 = arith.constant 0 : index
    %c0_65 = arith.constant 0 : index
    %221 = vector.load %arg7[%c1_63, %c0_64, %c0_65] : memref<2x8x96xf32, #tpu.memory_space<vmem>>, vector<1x8x96xf32>
    %222 = vector.shape_cast %221 : vector<1x8x96xf32> to vector<8x96xf32>
    %223 = vector.extract_strided_slice %220 {offsets = [0, 0], sizes = [32, 96], strides = [1, 1]} : vector<32x192xbf16> to vector<32x96xbf16>
    %224 = arith.truncf %218 : vector<16x32xf32> to vector<16x32xbf16>
    %cst_66 = arith.constant dense<0.000000e+00> : vector<16x96xf32>
    %225 = tpu.matmul %224, %223, %cst_66 {dimension_numbers = #tpu.dot_dimension_numbers<[1], [0], [0], [1], [0, 0, 1, 1], [], []>} : vector<16x32xbf16>, vector<32x96xbf16>, vector<16x96xf32> -> vector<16x96xf32>
    %226 = vector.extract_strided_slice %222 {offsets = [0, 0], sizes = [1, 96], strides = [1, 1]} : vector<8x96xf32> to vector<1x96xf32>
    %227 = vector.broadcast %226 : vector<1x96xf32> to vector<16x96xf32>
    %228 = arith.addf %225, %227 : vector<16x96xf32>
    %229 = vector.extract_strided_slice %228 {offsets = [0, 0], sizes = [16, 8], strides = [1, 1]} : vector<16x96xf32> to vector<16x8xf32>
    %230 = vector.extract_strided_slice %228 {offsets = [0, 32], sizes = [16, 8], strides = [1, 1]} : vector<16x96xf32> to vector<16x8xf32>
    %231 = vector.extract_strided_slice %228 {offsets = [0, 64], sizes = [16, 8], strides = [1, 1]} : vector<16x96xf32> to vector<16x8xf32>
    %232 = arith.truncf %229 : vector<16x8xf32> to vector<16x8xbf16>
    %233 = arith.truncf %230 : vector<16x8xf32> to vector<16x8xbf16>
    %cst_67 = arith.constant dense<0.000000e+00> : vector<16x16xf32>
    %234 = tpu.matmul %232, %233, %cst_67 {dimension_numbers = #tpu.dot_dimension_numbers<[1], [1], [0], [0], [0, 0, 1, 0], [], []>} : vector<16x8xbf16>, vector<16x8xbf16>, vector<16x16xf32> -> vector<16x16xf32>
    %235 = arith.addf %234, %45 : vector<16x16xf32>
    %cst_68 = arith.constant dense<0xFF800000> : vector<16xf32>
    %236 = vector.multi_reduction <maximumf>, %235, %cst_68 [1] : vector<16x16xf32> to vector<16xf32>
    %237 = vector.shape_cast %236 : vector<16xf32> to vector<16x1xf32>
    %238 = vector.broadcast %237 : vector<16x1xf32> to vector<16x16xf32>
    %239 = arith.subf %235, %238 : vector<16x16xf32>
    %240 = math.exp %239 : vector<16x16xf32>
    %cst_69 = arith.constant dense<0.000000e+00> : vector<16xf32>
    %241 = vector.multi_reduction <add>, %240, %cst_69 [1] : vector<16x16xf32> to vector<16xf32>
    %242 = vector.shape_cast %241 : vector<16xf32> to vector<16x1xf32>
    %243 = tpu.reciprocal %242 {approx = true} : vector<16x1xf32> -> vector<16x1xf32>
    %244 = vector.broadcast %243 : vector<16x1xf32> to vector<16x16xf32>
    %245 = arith.mulf %240, %244 : vector<16x16xf32>
    %246 = arith.truncf %245 : vector<16x16xf32> to vector<16x16xbf16>
    %247 = arith.truncf %231 : vector<16x8xf32> to vector<16x8xbf16>
    %cst_70 = arith.constant dense<0.000000e+00> : vector<16x8xf32>
    %248 = tpu.matmul %246, %247, %cst_70 {dimension_numbers = #tpu.dot_dimension_numbers<[1], [0], [0], [1], [0, 0, 1, 1], [], []>} : vector<16x16xbf16>, vector<16x8xbf16>, vector<16x8xf32> -> vector<16x8xf32>
    %249 = vector.extract_strided_slice %228 {offsets = [0, 8], sizes = [16, 8], strides = [1, 1]} : vector<16x96xf32> to vector<16x8xf32>
    %250 = vector.extract_strided_slice %228 {offsets = [0, 40], sizes = [16, 8], strides = [1, 1]} : vector<16x96xf32> to vector<16x8xf32>
    %251 = vector.extract_strided_slice %228 {offsets = [0, 72], sizes = [16, 8], strides = [1, 1]} : vector<16x96xf32> to vector<16x8xf32>
    %252 = arith.truncf %249 : vector<16x8xf32> to vector<16x8xbf16>
    %253 = arith.truncf %250 : vector<16x8xf32> to vector<16x8xbf16>
    %cst_71 = arith.constant dense<0.000000e+00> : vector<16x16xf32>
    %254 = tpu.matmul %252, %253, %cst_71 {dimension_numbers = #tpu.dot_dimension_numbers<[1], [1], [0], [0], [0, 0, 1, 0], [], []>} : vector<16x8xbf16>, vector<16x8xbf16>, vector<16x16xf32> -> vector<16x16xf32>
    %255 = arith.addf %254, %45 : vector<16x16xf32>
    %cst_72 = arith.constant dense<0xFF800000> : vector<16xf32>
    %256 = vector.multi_reduction <maximumf>, %255, %cst_72 [1] : vector<16x16xf32> to vector<16xf32>
    %257 = vector.shape_cast %256 : vector<16xf32> to vector<16x1xf32>
    %258 = vector.broadcast %257 : vector<16x1xf32> to vector<16x16xf32>
    %259 = arith.subf %255, %258 : vector<16x16xf32>
    %260 = math.exp %259 : vector<16x16xf32>
    %cst_73 = arith.constant dense<0.000000e+00> : vector<16xf32>
    %261 = vector.multi_reduction <add>, %260, %cst_73 [1] : vector<16x16xf32> to vector<16xf32>
    %262 = vector.shape_cast %261 : vector<16xf32> to vector<16x1xf32>
    %263 = tpu.reciprocal %262 {approx = true} : vector<16x1xf32> -> vector<16x1xf32>
    %264 = vector.broadcast %263 : vector<16x1xf32> to vector<16x16xf32>
    %265 = arith.mulf %260, %264 : vector<16x16xf32>
    %266 = arith.truncf %265 : vector<16x16xf32> to vector<16x16xbf16>
    %267 = arith.truncf %251 : vector<16x8xf32> to vector<16x8xbf16>
    %cst_74 = arith.constant dense<0.000000e+00> : vector<16x8xf32>
    %268 = tpu.matmul %266, %267, %cst_74 {dimension_numbers = #tpu.dot_dimension_numbers<[1], [0], [0], [1], [0, 0, 1, 1], [], []>} : vector<16x16xbf16>, vector<16x8xbf16>, vector<16x8xf32> -> vector<16x8xf32>
    %269 = vector.extract_strided_slice %228 {offsets = [0, 16], sizes = [16, 8], strides = [1, 1]} : vector<16x96xf32> to vector<16x8xf32>
    %270 = vector.extract_strided_slice %228 {offsets = [0, 48], sizes = [16, 8], strides = [1, 1]} : vector<16x96xf32> to vector<16x8xf32>
    %271 = vector.extract_strided_slice %228 {offsets = [0, 80], sizes = [16, 8], strides = [1, 1]} : vector<16x96xf32> to vector<16x8xf32>
    %272 = arith.truncf %269 : vector<16x8xf32> to vector<16x8xbf16>
    %273 = arith.truncf %270 : vector<16x8xf32> to vector<16x8xbf16>
    %cst_75 = arith.constant dense<0.000000e+00> : vector<16x16xf32>
    %274 = tpu.matmul %272, %273, %cst_75 {dimension_numbers = #tpu.dot_dimension_numbers<[1], [1], [0], [0], [0, 0, 1, 0], [], []>} : vector<16x8xbf16>, vector<16x8xbf16>, vector<16x16xf32> -> vector<16x16xf32>
    %275 = arith.addf %274, %45 : vector<16x16xf32>
    %cst_76 = arith.constant dense<0xFF800000> : vector<16xf32>
    %276 = vector.multi_reduction <maximumf>, %275, %cst_76 [1] : vector<16x16xf32> to vector<16xf32>
    %277 = vector.shape_cast %276 : vector<16xf32> to vector<16x1xf32>
    %278 = vector.broadcast %277 : vector<16x1xf32> to vector<16x16xf32>
    %279 = arith.subf %275, %278 : vector<16x16xf32>
    %280 = math.exp %279 : vector<16x16xf32>
    %cst_77 = arith.constant dense<0.000000e+00> : vector<16xf32>
    %281 = vector.multi_reduction <add>, %280, %cst_77 [1] : vector<16x16xf32> to vector<16xf32>
    %282 = vector.shape_cast %281 : vector<16xf32> to vector<16x1xf32>
    %283 = tpu.reciprocal %282 {approx = true} : vector<16x1xf32> -> vector<16x1xf32>
    %284 = vector.broadcast %283 : vector<16x1xf32> to vector<16x16xf32>
    %285 = arith.mulf %280, %284 : vector<16x16xf32>
    %286 = arith.truncf %285 : vector<16x16xf32> to vector<16x16xbf16>
    %287 = arith.truncf %271 : vector<16x8xf32> to vector<16x8xbf16>
    %cst_78 = arith.constant dense<0.000000e+00> : vector<16x8xf32>
    %288 = tpu.matmul %286, %287, %cst_78 {dimension_numbers = #tpu.dot_dimension_numbers<[1], [0], [0], [1], [0, 0, 1, 1], [], []>} : vector<16x16xbf16>, vector<16x8xbf16>, vector<16x8xf32> -> vector<16x8xf32>
    %289 = vector.extract_strided_slice %228 {offsets = [0, 24], sizes = [16, 8], strides = [1, 1]} : vector<16x96xf32> to vector<16x8xf32>
    %290 = vector.extract_strided_slice %228 {offsets = [0, 56], sizes = [16, 8], strides = [1, 1]} : vector<16x96xf32> to vector<16x8xf32>
    %291 = vector.extract_strided_slice %228 {offsets = [0, 88], sizes = [16, 8], strides = [1, 1]} : vector<16x96xf32> to vector<16x8xf32>
    %292 = arith.truncf %289 : vector<16x8xf32> to vector<16x8xbf16>
    %293 = arith.truncf %290 : vector<16x8xf32> to vector<16x8xbf16>
    %cst_79 = arith.constant dense<0.000000e+00> : vector<16x16xf32>
    %294 = tpu.matmul %292, %293, %cst_79 {dimension_numbers = #tpu.dot_dimension_numbers<[1], [1], [0], [0], [0, 0, 1, 0], [], []>} : vector<16x8xbf16>, vector<16x8xbf16>, vector<16x16xf32> -> vector<16x16xf32>
    %295 = arith.addf %294, %45 : vector<16x16xf32>
    %cst_80 = arith.constant dense<0xFF800000> : vector<16xf32>
    %296 = vector.multi_reduction <maximumf>, %295, %cst_80 [1] : vector<16x16xf32> to vector<16xf32>
    %297 = vector.shape_cast %296 : vector<16xf32> to vector<16x1xf32>
    %298 = vector.broadcast %297 : vector<16x1xf32> to vector<16x16xf32>
    %299 = arith.subf %295, %298 : vector<16x16xf32>
    %300 = math.exp %299 : vector<16x16xf32>
    %cst_81 = arith.constant dense<0.000000e+00> : vector<16xf32>
    %301 = vector.multi_reduction <add>, %300, %cst_81 [1] : vector<16x16xf32> to vector<16xf32>
    %302 = vector.shape_cast %301 : vector<16xf32> to vector<16x1xf32>
    %303 = tpu.reciprocal %302 {approx = true} : vector<16x1xf32> -> vector<16x1xf32>
    %304 = vector.broadcast %303 : vector<16x1xf32> to vector<16x16xf32>
    %305 = arith.mulf %300, %304 : vector<16x16xf32>
    %306 = arith.truncf %305 : vector<16x16xf32> to vector<16x16xbf16>
    %307 = arith.truncf %291 : vector<16x8xf32> to vector<16x8xbf16>
    %cst_82 = arith.constant dense<0.000000e+00> : vector<16x8xf32>
    %308 = tpu.matmul %306, %307, %cst_82 {dimension_numbers = #tpu.dot_dimension_numbers<[1], [0], [0], [1], [0, 0, 1, 1], [], []>} : vector<16x16xbf16>, vector<16x8xbf16>, vector<16x8xf32> -> vector<16x8xf32>
    %309 = tpu.concatenate %248, %268, %288, %308 in 1 : vector<16x8xf32>, vector<16x8xf32>, vector<16x8xf32>, vector<16x8xf32> -> vector<16x32xf32>
    %310 = vector.extract_strided_slice %220 {offsets = [0, 96], sizes = [32, 32], strides = [1, 1]} : vector<32x192xbf16> to vector<32x32xbf16>
    %311 = arith.truncf %309 : vector<16x32xf32> to vector<16x32xbf16>
    %cst_83 = arith.constant dense<0.000000e+00> : vector<16x32xf32>
    %312 = tpu.matmul %311, %310, %cst_83 {dimension_numbers = #tpu.dot_dimension_numbers<[1], [0], [0], [1], [0, 0, 1, 1], [], []>} : vector<16x32xbf16>, vector<32x32xbf16>, vector<16x32xf32> -> vector<16x32xf32>
    %313 = vector.extract_strided_slice %222 {offsets = [1, 0], sizes = [1, 32], strides = [1, 1]} : vector<8x96xf32> to vector<1x32xf32>
    %314 = vector.broadcast %313 : vector<1x32xf32> to vector<16x32xf32>
    %315 = arith.addf %312, %314 : vector<16x32xf32>
    %316 = arith.addf %315, %218 : vector<16x32xf32>
    %317 = vector.extract_strided_slice %222 {offsets = [2, 0], sizes = [1, 32], strides = [1, 1]} : vector<8x96xf32> to vector<1x32xf32>
    %318 = vector.extract_strided_slice %222 {offsets = [3, 0], sizes = [1, 32], strides = [1, 1]} : vector<8x96xf32> to vector<1x32xf32>
    %cst_84 = arith.constant dense<0.000000e+00> : vector<16xf32>
    %319 = vector.multi_reduction <add>, %316, %cst_84 [1] : vector<16x32xf32> to vector<16xf32>
    %320 = vector.shape_cast %319 : vector<16xf32> to vector<16x1xf32>
    %cst_85 = arith.constant 3.200000e+01 : f32
    %321 = vector.broadcast %cst_85 : f32 to vector<16x1xf32>
    %322 = arith.divf %320, %321 : vector<16x1xf32>
    %323 = vector.broadcast %322 : vector<16x1xf32> to vector<16x32xf32>
    %324 = arith.subf %316, %323 : vector<16x32xf32>
    %325 = arith.mulf %324, %324 : vector<16x32xf32>
    %cst_86 = arith.constant dense<0.000000e+00> : vector<16xf32>
    %326 = vector.multi_reduction <add>, %325, %cst_86 [1] : vector<16x32xf32> to vector<16xf32>
    %327 = vector.shape_cast %326 : vector<16xf32> to vector<16x1xf32>
    %cst_87 = arith.constant 3.200000e+01 : f32
    %328 = vector.broadcast %cst_87 : f32 to vector<16x1xf32>
    %329 = arith.divf %327, %328 : vector<16x1xf32>
    %330 = vector.broadcast %322 : vector<16x1xf32> to vector<16x32xf32>
    %331 = arith.subf %316, %330 : vector<16x32xf32>
    %cst_88 = arith.constant 9.99999974E-6 : f32
    %332 = vector.broadcast %cst_88 : f32 to vector<16x1xf32>
    %333 = arith.addf %329, %332 : vector<16x1xf32>
    %334 = math.rsqrt %333 : vector<16x1xf32>
    %335 = vector.broadcast %334 : vector<16x1xf32> to vector<16x32xf32>
    %336 = arith.mulf %331, %335 : vector<16x32xf32>
    %337 = vector.broadcast %317 : vector<1x32xf32> to vector<16x32xf32>
    %338 = arith.mulf %336, %337 : vector<16x32xf32>
    %339 = vector.broadcast %318 : vector<1x32xf32> to vector<16x32xf32>
    %340 = arith.addf %338, %339 : vector<16x32xf32>
    %341 = vector.extract_strided_slice %220 {offsets = [0, 128], sizes = [32, 64], strides = [1, 1]} : vector<32x192xbf16> to vector<32x64xbf16>
    %342 = arith.truncf %340 : vector<16x32xf32> to vector<16x32xbf16>
    %cst_89 = arith.constant dense<0.000000e+00> : vector<16x64xf32>
    %343 = tpu.matmul %342, %341, %cst_89 {dimension_numbers = #tpu.dot_dimension_numbers<[1], [0], [0], [1], [0, 0, 1, 1], [], []>} : vector<16x32xbf16>, vector<32x64xbf16>, vector<16x64xf32> -> vector<16x64xf32>
    %344 = vector.extract_strided_slice %222 {offsets = [4, 0], sizes = [1, 64], strides = [1, 1]} : vector<8x96xf32> to vector<1x64xf32>
    %345 = vector.broadcast %344 : vector<1x64xf32> to vector<16x64xf32>
    %346 = arith.addf %343, %345 : vector<16x64xf32>
    %cst_90 = arith.constant 5.000000e-01 : f32
    %347 = vector.broadcast %cst_90 : f32 to vector<16x64xf32>
    %348 = arith.mulf %347, %346 : vector<16x64xf32>
    %cst_91 = arith.constant 4.471500e-02 : f32
    %349 = vector.broadcast %cst_91 : f32 to vector<16x64xf32>
    %350 = arith.mulf %349, %346 : vector<16x64xf32>
    %351 = arith.mulf %350, %346 : vector<16x64xf32>
    %352 = arith.mulf %351, %346 : vector<16x64xf32>
    %353 = arith.addf %346, %352 : vector<16x64xf32>
    %cst_92 = arith.constant 0.797884583 : f32
    %354 = vector.broadcast %cst_92 : f32 to vector<16x64xf32>
    %355 = arith.mulf %354, %353 : vector<16x64xf32>
    %356 = math.tanh %355 : vector<16x64xf32>
    %cst_93 = arith.constant 1.000000e+00 : f32
    %357 = vector.broadcast %cst_93 : f32 to vector<16x64xf32>
    %358 = arith.addf %357, %356 : vector<16x64xf32>
    %359 = arith.mulf %348, %358 : vector<16x64xf32>
    %c1_94 = arith.constant 1 : index
    %c0_95 = arith.constant 0 : index
    %c0_96 = arith.constant 0 : index
    %360 = vector.load %arg5[%c1_94, %c0_95, %c0_96] : memref<2x64x32xbf16, #tpu.memory_space<vmem>>, vector<1x64x32xbf16>
    %361 = vector.shape_cast %360 : vector<1x64x32xbf16> to vector<64x32xbf16>
    %362 = arith.truncf %359 : vector<16x64xf32> to vector<16x64xbf16>
    %cst_97 = arith.constant dense<0.000000e+00> : vector<16x32xf32>
    %363 = tpu.matmul %362, %361, %cst_97 {dimension_numbers = #tpu.dot_dimension_numbers<[1], [0], [0], [1], [0, 0, 1, 1], [], []>} : vector<16x64xbf16>, vector<64x32xbf16>, vector<16x32xf32> -> vector<16x32xf32>
    %364 = vector.extract_strided_slice %222 {offsets = [5, 0], sizes = [1, 32], strides = [1, 1]} : vector<8x96xf32> to vector<1x32xf32>
    %365 = vector.broadcast %364 : vector<1x32xf32> to vector<16x32xf32>
    %366 = arith.addf %363, %365 : vector<16x32xf32>
    %367 = arith.addf %366, %340 : vector<16x32xf32>
    %368 = vector.extract_strided_slice %222 {offsets = [6, 0], sizes = [1, 32], strides = [1, 1]} : vector<8x96xf32> to vector<1x32xf32>
    %369 = vector.extract_strided_slice %222 {offsets = [7, 0], sizes = [1, 32], strides = [1, 1]} : vector<8x96xf32> to vector<1x32xf32>
    %cst_98 = arith.constant dense<0.000000e+00> : vector<16xf32>
    %370 = vector.multi_reduction <add>, %367, %cst_98 [1] : vector<16x32xf32> to vector<16xf32>
    %371 = vector.shape_cast %370 : vector<16xf32> to vector<16x1xf32>
    %cst_99 = arith.constant 3.200000e+01 : f32
    %372 = vector.broadcast %cst_99 : f32 to vector<16x1xf32>
    %373 = arith.divf %371, %372 : vector<16x1xf32>
    %374 = vector.broadcast %373 : vector<16x1xf32> to vector<16x32xf32>
    %375 = arith.subf %367, %374 : vector<16x32xf32>
    %376 = arith.mulf %375, %375 : vector<16x32xf32>
    %cst_100 = arith.constant dense<0.000000e+00> : vector<16xf32>
    %377 = vector.multi_reduction <add>, %376, %cst_100 [1] : vector<16x32xf32> to vector<16xf32>
    %378 = vector.shape_cast %377 : vector<16xf32> to vector<16x1xf32>
    %cst_101 = arith.constant 3.200000e+01 : f32
    %379 = vector.broadcast %cst_101 : f32 to vector<16x1xf32>
    %380 = arith.divf %378, %379 : vector<16x1xf32>
    %381 = vector.broadcast %373 : vector<16x1xf32> to vector<16x32xf32>
    %382 = arith.subf %367, %381 : vector<16x32xf32>
    %cst_102 = arith.constant 9.99999974E-6 : f32
    %383 = vector.broadcast %cst_102 : f32 to vector<16x1xf32>
    %384 = arith.addf %380, %383 : vector<16x1xf32>
    %385 = math.rsqrt %384 : vector<16x1xf32>
    %386 = vector.broadcast %385 : vector<16x1xf32> to vector<16x32xf32>
    %387 = arith.mulf %382, %386 : vector<16x32xf32>
    %388 = vector.broadcast %368 : vector<1x32xf32> to vector<16x32xf32>
    %389 = arith.mulf %387, %388 : vector<16x32xf32>
    %390 = vector.broadcast %369 : vector<1x32xf32> to vector<16x32xf32>
    %391 = arith.addf %389, %390 : vector<16x32xf32>
    %c0_103 = arith.constant 0 : index
    %c0_104 = arith.constant 0 : index
    %392 = vector.load %arg6[%c0_103, %c0_104] : memref<32x160xbf16, #tpu.memory_space<vmem>>, vector<32x160xbf16>
    %393 = vector.extract_strided_slice %392 {offsets = [0, 0], sizes = [32, 32], strides = [1, 1]} : vector<32x160xbf16> to vector<32x32xbf16>
    %394 = arith.truncf %391 : vector<16x32xf32> to vector<16x32xbf16>
    %cst_105 = arith.constant dense<0.000000e+00> : vector<16x32xf32>
    %395 = tpu.matmul %394, %393, %cst_105 {dimension_numbers = #tpu.dot_dimension_numbers<[1], [0], [0], [1], [0, 0, 1, 1], [], []>} : vector<16x32xbf16>, vector<32x32xbf16>, vector<16x32xf32> -> vector<16x32xf32>
    %396 = vector.extract_strided_slice %17 {offsets = [2, 0], sizes = [1, 32], strides = [1, 1]} : vector<8x128xf32> to vector<1x32xf32>
    %397 = vector.broadcast %396 : vector<1x32xf32> to vector<16x32xf32>
    %398 = arith.addf %395, %397 : vector<16x32xf32>
    %399 = math.tanh %398 : vector<16x32xf32>
    %400 = vector.extract_strided_slice %392 {offsets = [0, 32], sizes = [32, 128], strides = [1, 1]} : vector<32x160xbf16> to vector<32x128xbf16>
    %401 = arith.truncf %399 : vector<16x32xf32> to vector<16x32xbf16>
    %cst_106 = arith.constant dense<0.000000e+00> : vector<16x128xf32>
    %402 = tpu.matmul %401, %400, %cst_106 {dimension_numbers = #tpu.dot_dimension_numbers<[1], [0], [0], [1], [0, 0, 1, 1], [], []>} : vector<16x32xbf16>, vector<32x128xbf16>, vector<16x128xf32> -> vector<16x128xf32>
    %403 = vector.extract_strided_slice %17 {offsets = [3, 0], sizes = [1, 128], strides = [1, 1]} : vector<8x128xf32> to vector<1x128xf32>
    %404 = vector.broadcast %403 : vector<1x128xf32> to vector<16x128xf32>
    %405 = arith.addf %402, %404 : vector<16x128xf32>
    %c0_107 = arith.constant 0 : index
    %c0_108 = arith.constant 0 : index
    %406 = vector.load %arg9[%c0_107, %c0_108] : memref<16x128xf32, #tpu.memory_space<vmem>>, vector<16x128xf32>
    tpu.vector_store %arg9[%c0_107, %c0_108], %405 {strides = array<i32>} : memref<16x128xf32, #tpu.memory_space<vmem>>, vector<16x128xf32>,
    return
  }
}

</mosaic_0001>

<llo_original>
// kernel: bert_class_forward.1
$region0: #{bert_class_forward.1}
  #allocation0 [shape = 'u32[]', space=smem, size = 0x4, offset = 0x4, fixed_abs, tag = 'smem constant byte address 0x4 - core index']
  #allocation1 [shape = 'u32[144,128]{1,0:T(1,128)}', space=vmem, size = 0x12000, scoped, tag = 'internal scratch']
  %s0 = inlined_call_operand.vmem [shape: s32[16,1], index: 0, kind: input, shape index: {}]
  %s1 = inlined_call_operand.vmem [shape: s32[16,1], index: 1, kind: input, shape index: {}]
  %s2 = inlined_call_operand.vmem [shape: f32[16,16], index: 2, kind: input, shape index: {}]
  %s3 = inlined_call_operand.vmem [shape: bf16[128,32], index: 3, kind: input, shape index: {}]
  %s4 = inlined_call_operand.vmem [shape: bf16[2,32,192], index: 4, kind: input, shape index: {}]
  %s5 = inlined_call_operand.vmem [shape: bf16[2,64,32], index: 5, kind: input, shape index: {}]
  %s6 = inlined_call_operand.vmem [shape: bf16[32,160], index: 6, kind: input, shape index: {}]
  %s7 = inlined_call_operand.vmem [shape: f32[2,8,96], index: 7, kind: input, shape index: {}]
  %s8 = inlined_call_operand.vmem [shape: f32[8,128], index: 8, kind: input, shape index: {}]
  %s9 = inlined_call_operand.vmem [shape: f32[16,128], index: 9, kind: output, shape index: {}]
  %s10 = sld [smem:[#allocation0]]
  $region46: #{bert_class_forward.1} parent=0
    _
  %s12 = ssub.s32 1, %s10
  %s13 = scalar_select 0, %s12, %s10
  // Predicated region
  $region2: #{bert_class_forward.1} parent=0 // pred_check
    _
  $region3: #{bert_class_forward.1} parent=0 // pred_check_branch
    %15 = sbr.rel (0) target = $region5
  $region4: #{bert_class_forward.1} parent=0 // pred_region
    _
  $region5: #{bert_class_forward.1} parent=0 // pred_fallthru
    _
  // Predicated region
  $region6: #{bert_class_forward.1} parent=0 // pred_check
    _
  $region7: #{bert_class_forward.1} parent=0 // pred_check_branch
    %17 = sbr.rel (0) target = $region9
  $region8: #{bert_class_forward.1} parent=0 // pred_region
    _
  $region9: #{bert_class_forward.1} parent=0 // pred_fallthru
    _
  // Predicated region
  $region10: #{bert_class_forward.1} parent=0 // pred_check
    _
  $region11: #{bert_class_forward.1} parent=0 // pred_check_branch
    %19 = sbr.rel (0) target = $region13
  $region12: #{bert_class_forward.1} parent=0 // pred_region
    _
  $region13: #{bert_class_forward.1} parent=0 // pred_fallthru
    _
  // Predicated region
  $region14: #{bert_class_forward.1} parent=0 // pred_check
    _
  $region15: #{bert_class_forward.1} parent=0 // pred_check_branch
    %21 = sbr.rel (0) target = $region17
  $region16: #{bert_class_forward.1} parent=0 // pred_region
    _
  $region17: #{bert_class_forward.1} parent=0 // pred_fallthru
    _
  // Predicated region
  $region18: #{bert_class_forward.1} parent=0 // pred_check
    _
  $region19: #{bert_class_forward.1} parent=0 // pred_check_branch
    %23 = sbr.rel (0) target = $region21
  $region20: #{bert_class_forward.1} parent=0 // pred_region
    _
  $region21: #{bert_class_forward.1} parent=0 // pred_fallthru
    _
  // Predicated region
  $region22: #{bert_class_forward.1} parent=0 // pred_check
    _
  $region23: #{bert_class_forward.1} parent=0 // pred_check_branch
    %25 = sbr.rel (0) target = $region25
  $region24: #{bert_class_forward.1} parent=0 // pred_region
    _
  $region25: #{bert_class_forward.1} parent=0 // pred_fallthru
    _
  // Predicated region
  $region26: #{bert_class_forward.1} parent=0 // pred_check
    _
  $region27: #{bert_class_forward.1} parent=0 // pred_check_branch
    %27 = sbr.rel (0) target = $region29
  $region28: #{bert_class_forward.1} parent=0 // pred_region
    _
  $region29: #{bert_class_forward.1} parent=0 // pred_fallthru
    _
  // Predicated region
  $region30: #{bert_class_forward.1} parent=0 // pred_check
    _
  $region31: #{bert_class_forward.1} parent=0 // pred_check_branch
    %29 = sbr.rel (0) target = $region33
  $region32: #{bert_class_forward.1} parent=0 // pred_region
    _
  $region33: #{bert_class_forward.1} parent=0 // pred_fallthru
    _
  // Predicated region
  $region34: #{bert_class_forward.1} parent=0 // pred_check
    _
  $region35: #{bert_class_forward.1} parent=0 // pred_check_branch
    %31 = sbr.rel (0) target = $region37
  $region36: #{bert_class_forward.1} parent=0 // pred_region
    _
  $region37: #{bert_class_forward.1} parent=0 // pred_fallthru
    _
  %v33 = vlaneseq
  %v34 = vand.u32 %v33, 127
  %v35 = vld [vmem:[%s0] sm:$0xff]
  %v36 = vld [vmem:[%s0 + $0x8] sm:$0xff]
  %37 = vset.pattern.permute.xlu0 0
  %38 = vperm.xlu0 %37, %v35
  %v39 = vpop.permute.xlu0 %38
  %40 = vset.pattern.permute.xlu0 0
  %41 = vperm.xlu0 %40, %v36
  %v42 = vpop.permute.xlu0 %41
  %vm43 = vcmp.eq.s32.totalorder %v34, %v39
  %vm44 = vcmp.eq.s32.totalorder %v34, %v42
  %v45 = vsel %vm43, 1.0, 0.0
  %v46 = vsel %vm44, 1.0, 0.0
  %v47 = vld [vmem:[%s1] sm:$0xff]
  %v48 = vld [vmem:[%s1 + $0x8] sm:$0xff]
  %49 = vset.pattern.permute.xlu0 0
  %50 = vperm.xlu0 %49, %v47
  %v51 = vpop.permute.xlu0 %50
  %52 = vset.pattern.permute.xlu0 0
  %53 = vperm.xlu0 %52, %v48
  %v54 = vpop.permute.xlu0 %53
  %vm55 = vcmp.eq.s32.totalorder %v34, %v51
  %vm56 = vcmp.eq.s32.totalorder %v34, %v54
  %v57 = vsel %vm55, 1.0, 0.0
  %v58 = vsel %vm56, 1.0, 0.0
  %v59 = vadd.f32 %v45, %v57
  %v60 = vadd.f32 %v46, %v58
  %v61 = vld [vmem:[%s3] sm:$0xf]
  %v62 = vld [vmem:[%s3 + $0x4] sm:$0xf]
  %v63 = vld [vmem:[%s3 + $0x8] sm:$0xf]
  %v64 = vld [vmem:[%s3 + $0xc] sm:$0xf]
  %v65 = vld [vmem:[%s3 + $0x10] sm:$0xf]
  %v66 = vld [vmem:[%s3 + $0x14] sm:$0xf]
  %v67 = vld [vmem:[%s3 + $0x18] sm:$0xf]
  %v68 = vld [vmem:[%s3 + $0x1c] sm:$0xf]
  %v69 = vld [vmem:[%s3 + $0x20] sm:$0xf]
  %v70 = vld [vmem:[%s3 + $0x24] sm:$0xf]
  %v71 = vld [vmem:[%s3 + $0x28] sm:$0xf]
  %v72 = vld [vmem:[%s3 + $0x2c] sm:$0xf]
  %v73 = vld [vmem:[%s3 + $0x30] sm:$0xf]
  %v74 = vld [vmem:[%s3 + $0x34] sm:$0xf]
  %v75 = vld [vmem:[%s3 + $0x38] sm:$0xf]
  %v76 = vld [vmem:[%s3 + $0x3c] sm:$0xf]
  %v77 = vpack.c.bf16 %v60, %v59
  %v78 = vld [vmem:[%s8] sm:$0xff]
  %v79 = vlaneseq
  %v80 = vshrl.u32 %v79, 7
  %v81 = vsub.s32 4, %v80
  %v82 = vrot.slane %v78, %v81
  %v99 = vunpack.c.l.b16 %v61
  %v100 = vunpack.c.l.b16 %v62
  %v101 = vunpack.c.l.b16 %v63
  %v102 = vunpack.c.l.b16 %v64
  %v103 = vunpack.c.l.b16 %v65
  %v104 = vunpack.c.l.b16 %v66
  %v105 = vunpack.c.l.b16 %v67
  %v106 = vunpack.c.l.b16 %v68
  %v107 = vunpack.c.l.b16 %v69
  %v108 = vunpack.c.l.b16 %v70
  %v109 = vunpack.c.l.b16 %v71
  %v110 = vunpack.c.l.b16 %v72
  %v111 = vunpack.c.l.b16 %v73
  %v112 = vunpack.c.l.b16 %v74
  %v113 = vunpack.c.l.b16 %v75
  %v114 = vunpack.c.l.b16 %v76
  %v115 = vpack.c.b16 %v100, %v99
  %v116 = vpack.c.b16 %v102, %v101
  %v117 = vpack.c.b16 %v104, %v103
  %v118 = vpack.c.b16 %v106, %v105
  %v119 = vpack.c.b16 %v108, %v107
  %v120 = vpack.c.b16 %v110, %v109
  %v121 = vpack.c.b16 %v112, %v111
  %v122 = vpack.c.b16 %v114, %v113
  %131 = vmatprep.subr.bf16.mxu0 0
  %132 = vmatpush1.bf16.msra.mxu0 %v115
  %133 = vmatprep.subr.bf16.mxu0 0
  %134 = vmatpush1.bf16.msra.mxu0 %v116
  %135 = vmatprep.subr.bf16.mxu0 0
  %136 = vmatpush1.bf16.msra.mxu0 %v117
  %137 = vmatprep.subr.bf16.mxu0 0
  %138 = vmatpush1.bf16.msra.mxu0 %v118
  %139 = vmatprep.subr.bf16.mxu0 0
  %140 = vmatpush1.bf16.msra.mxu0 %v119
  %141 = vmatprep.subr.bf16.mxu0 0
  %142 = vmatpush1.bf16.msra.mxu0 %v120
  %143 = vmatprep.subr.bf16.mxu0 0
  %144 = vmatpush1.bf16.msra.mxu0 %v121
  %145 = vmatprep.subr.bf16.mxu0 0
  %146 = vmatpush1.bf16.msra.mxu0 %v122
  %147 = vmatprep.subr.bf16.mxu0 0
  %148 = vmatpush1.bf16.msra.mxu0 0
  %149 = vmatprep.subr.bf16.mxu0 0
  %150 = vmatpush1.bf16.msra.mxu0 0
  %151 = vmatprep.subr.bf16.mxu0 0
  %152 = vmatpush1.bf16.msra.mxu0 0
  %153 = vmatprep.subr.bf16.mxu0 0
  %154 = vmatpush1.bf16.msra.mxu0 0
  %155 = vmatprep.subr.bf16.mxu0 0
  %156 = vmatpush1.bf16.msra.mxu0 0
  %157 = vmatprep.subr.bf16.mxu0 0
  %158 = vmatpush1.bf16.msra.mxu0 0
  %159 = vmatprep.subr.bf16.mxu0 0
  %160 = vmatpush1.bf16.msra.mxu0 0
  %161 = vmatprep.subr.bf16.mxu0 0
  %162 = vmatpush1.bf16.msra.mxu0 0
  %163 = vmatprep.mubr.bf16.mxu0 0
  %164 = vmatmul.mubr.bf16.gmra.mrb[0].mxu0 %v77
  %v165 = vpop.f32.mrb[0].mxu0
  %v166 = vadd.f32 %v82, %v165
  %v167 = vpop.f32.mrb[0].mxu0
  %v168 = vpop.f32.mrb[0].mxu0
  %v169 = vadd.f32 %v82, %v168
  %v170 = vpop.f32.mrb[0].mxu0
  %171 = vdwg.mxu0
  %vm172 = vcmask 261120
  %v173 = vsel %vm172, %v166, 0.0
  %174 = vadd.xlane.f32.xlu0 %v173
  %v175 = vpop.xlane.xlu0 %174
  %v176 = vsel %vm172, %v169, 0.0
  %177 = vadd.xlane.f32.xlu0 %v176
  %v178 = vpop.xlane.xlu0 %177
  %v179 = vrcp.pop 32.0
  %v180 = vmul.f32 %v175, %v179
  %v181 = vmul.f32 %v178, %v179
  %v182 = vsub.f32 %v166, %v180
  %v183 = vsub.f32 %v169, %v181
  %v184 = vmul.f32 %v182, %v182
  %v185 = vmul.f32 %v183, %v183
  %v186 = vsel %vm172, %v184, 0.0
  %187 = vadd.xlane.f32.xlu0 %v186
  %v188 = vpop.xlane.xlu0 %187
  %v189 = vsel %vm172, %v185, 0.0
  %190 = vadd.xlane.f32.xlu0 %v189
  %v191 = vpop.xlane.xlu0 %190
  %v192 = vmul.f32 %v188, %v179
  %v193 = vmul.f32 %v191, %v179
  %v194 = vadd.f32 %v192, 1e-05
  %v195 = vadd.f32 %v193, 1e-05
  %v196 = vrsqrt.pop %v194
  %v197 = vrsqrt.pop %v195
  %v198 = vmul.f32 %v182, %v196
  %v199 = vmul.f32 %v183, %v197
  %v200 = vlaneseq
  %v201 = vshrl.u32 %v200, 7
  %v202 = vsub.s32 0, %v201
  %v203 = vrot.slane %v78, %v202
  %v204 = vmul.f32 %v198, %v203
  %v205 = vmul.f32 %v199, %v203
  %v206 = vlaneseq
  %v207 = vshrl.u32 %v206, 7
  %v208 = vsub.s32 1, %v207
  %v209 = vrot.slane %v78, %v208
  %v210 = vadd.f32 %v204, %v209
  %v211 = vadd.f32 %v205, %v209
  %v212 = vld [vmem:[%s2] sm:$0xff]
  %v213 = vld [vmem:[%s2 + $0x8] sm:$0xff]
  %v214 = vld [vmem:[%s4] sm:$0xff]
  %v215 = vld [vmem:[%s4 + $0x8] sm:$0xff]
  %v216 = vld [vmem:[%s4 + $0x10] sm:$0xff]
  %v217 = vld [vmem:[%s4 + $0x18] sm:$0xff]
  %v218 = vld [vmem:[%s7] sm:$0xff]
  %v219 = vpack.c.bf16 %v211, %v210
  %v220 = vlaneseq
  %v221 = vshrl.u32 %v220, 7
  %v222 = vsub.s32 0, %v221
  %v223 = vrot.slane %v218, %v222
  %v228 = vunpack.c.l.b16 %v214
  %v229 = vunpack.c.l.b16 %v215
  %v230 = vunpack.c.l.b16 %v216
  %v231 = vunpack.c.l.b16 %v217
  %v232 = vpack.c.b16 %v229, %v228
  %v233 = vpack.c.b16 %v231, %v230
  %v237 = vsel %vm172, %v219, 0
  %239 = vmatprep.subr.bf16.mxu0 0
  %240 = vmatpush1.bf16.msra.mxu0 %v232
  %241 = vmatprep.subr.bf16.mxu0 0
  %242 = vmatpush1.bf16.msra.mxu0 %v233
  %243 = vmatprep.subr.bf16.mxu0 0
  %244 = vmatpush1.bf16.msra.mxu0 0
  %245 = vmatprep.subr.bf16.mxu0 0
  %246 = vmatpush1.bf16.msra.mxu0 0
  %247 = vmatprep.subr.bf16.mxu0 0
  %248 = vmatpush1.bf16.msra.mxu0 0
  %249 = vmatprep.subr.bf16.mxu0 0
  %250 = vmatpush1.bf16.msra.mxu0 0
  %251 = vmatprep.subr.bf16.mxu0 0
  %252 = vmatpush1.bf16.msra.mxu0 0
  %253 = vmatprep.subr.bf16.mxu0 0
  %254 = vmatpush1.bf16.msra.mxu0 0
  %255 = vmatprep.subr.bf16.mxu0 0
  %256 = vmatpush1.bf16.msra.mxu0 0
  %257 = vmatprep.subr.bf16.mxu0 0
  %258 = vmatpush1.bf16.msra.mxu0 0
  %259 = vmatprep.subr.bf16.mxu0 0
  %260 = vmatpush1.bf16.msra.mxu0 0
  %261 = vmatprep.subr.bf16.mxu0 0
  %262 = vmatpush1.bf16.msra.mxu0 0
  %263 = vmatprep.subr.bf16.mxu0 0
  %264 = vmatpush1.bf16.msra.mxu0 0
  %265 = vmatprep.subr.bf16.mxu0 0
  %266 = vmatpush1.bf16.msra.mxu0 0
  %267 = vmatprep.subr.bf16.mxu0 0
  %268 = vmatpush1.bf16.msra.mxu0 0
  %269 = vmatprep.subr.bf16.mxu0 0
  %270 = vmatpush1.bf16.msra.mxu0 0
  %271 = vmatprep.mubr.bf16.mxu0 0
  %272 = vmatmul.mubr.bf16.gmra.mrb[0].mxu0 %v237
  %v273 = vpop.f32.mrb[0].mxu0
  %v274 = vadd.f32 %v223, %v273
  %v275 = vpop.f32.mrb[0].mxu0
  %v276 = vpop.f32.mrb[0].mxu0
  %v277 = vadd.f32 %v223, %v276
  %v278 = vpop.f32.mrb[0].mxu0
  %279 = vdwg.mxu0
  %v280 = vpack.c.bf16 %v277, %v274
  %282 = vrot.lane.b32.xlu0 %v280, 96
  %v283 = vpop.permute.xlu0 %282
  %vm284 = vcmask 64512
  %v286 = vsel %vm284, %v280, 0
  %v289 = vsel %vm284, %v283, 0
  %291 = vmatprep.subr.bf16.mxu0 0
  %292 = vmatpush1.bf16.xpose.msra.mxu0 %v289
  %293 = vmatprep.subr.bf16.mxu0 0
  %294 = vmatpush1.bf16.xpose.msra.mxu0 0
  %295 = vmatprep.subr.bf16.mxu0 0
  %296 = vmatpush1.bf16.xpose.msra.mxu0 0
  %297 = vmatprep.subr.bf16.mxu0 0
  %298 = vmatpush1.bf16.xpose.msra.mxu0 0
  %299 = vmatprep.subr.bf16.mxu0 0
  %300 = vmatpush1.bf16.xpose.msra.mxu0 0
  %301 = vmatprep.subr.bf16.mxu0 0
  %302 = vmatpush1.bf16.xpose.msra.mxu0 0
  %303 = vmatprep.subr.bf16.mxu0 0
  %304 = vmatpush1.bf16.xpose.msra.mxu0 0
  %305 = vmatprep.subr.bf16.mxu0 0
  %306 = vmatpush1.bf16.xpose.msra.mxu0 0
  %307 = vmatprep.subr.bf16.mxu0 0
  %308 = vmatpush1.bf16.xpose.msra.mxu0 0
  %309 = vmatprep.subr.bf16.mxu0 0
  %310 = vmatpush1.bf16.xpose.msra.mxu0 0
  %311 = vmatprep.subr.bf16.mxu0 0
  %312 = vmatpush1.bf16.xpose.msra.mxu0 0
  %313 = vmatprep.subr.bf16.mxu0 0
  %314 = vmatpush1.bf16.xpose.msra.mxu0 0
  %315 = vmatprep.subr.bf16.mxu0 0
  %316 = vmatpush1.bf16.xpose.msra.mxu0 0
  %317 = vmatprep.subr.bf16.mxu0 0
  %318 = vmatpush1.bf16.xpose.msra.mxu0 0
  %319 = vmatprep.subr.bf16.mxu0 0
  %320 = vmatpush1.bf16.xpose.msra.mxu0 0
  %321 = vmatprep.subr.bf16.mxu0 0
  %322 = vmatpush1.bf16.xpose.msra.mxu0 0
  %323 = vmatprep.mubr.bf16.mxu0 0
  %324 = vmatmul.mubr.bf16.gmra.mrb[0].mxu0 %v286
  %v325 = vpop.f32.mrb[0].mxu0
  %v326 = vadd.f32 %v212, %v325
  %v327 = vpop.f32.mrb[0].mxu0
  %v328 = vpop.f32.mrb[0].mxu0
  %v329 = vadd.f32 %v213, %v328
  %v330 = vpop.f32.mrb[0].mxu0
  %331 = vdwg.mxu0
  %vm332 = vcmask 130048
  %v333 = vsel %vm332, %v326, -inf
  %334 = vmax.xlane.f32.xlu0 %v333
  %v335 = vpop.xlane.xlu0 %334
  %v336 = vsel %vm332, %v329, -inf
  %337 = vmax.xlane.f32.xlu0 %v336
  %v338 = vpop.xlane.xlu0 %337
  %v339 = vsub.f32 %v326, %v335
  %v340 = vsub.f32 %v329, %v338
  %v341 = vmul.f32 %v339, 1.442695
  %v342 = vpow.pop %v341
  %v343 = vmul.f32 %v340, 1.442695
  %v344 = vpow.pop %v343
  %v345 = vsel %vm332, %v342, 0.0
  %346 = vadd.xlane.f32.xlu0 %v345
  %v347 = vpop.xlane.xlu0 %346
  %v348 = vsel %vm332, %v344, 0.0
  %349 = vadd.xlane.f32.xlu0 %v348
  %v350 = vpop.xlane.xlu0 %349
  %v351 = vrcp.pop %v347
  %v352 = vrcp.pop %v350
  %v353 = vmul.f32 %v342, %v351
  %v354 = vmul.f32 %v344, %v352
  %v355 = vpack.c.bf16 %v354, %v353
  %356 = vrot.lane.b32.xlu0 %v280, 64
  %v357 = vpop.permute.xlu0 %356
  %v360 = vsel %vm332, %v355, 0
  %362 = vmatprep.subr.bf16.mxu0 0
  %363 = vmatpush1.bf16.msra.mxu0 %v357
  %364 = vmatprep.subr.bf16.mxu0 0
  %365 = vmatpush1.bf16.msra.mxu0 0
  %366 = vmatprep.subr.bf16.mxu0 0
  %367 = vmatpush1.bf16.msra.mxu0 0
  %368 = vmatprep.subr.bf16.mxu0 0
  %369 = vmatpush1.bf16.msra.mxu0 0
  %370 = vmatprep.subr.bf16.mxu0 0
  %371 = vmatpush1.bf16.msra.mxu0 0
  %372 = vmatprep.subr.bf16.mxu0 0
  %373 = vmatpush1.bf16.msra.mxu0 0
  %374 = vmatprep.subr.bf16.mxu0 0
  %375 = vmatpush1.bf16.msra.mxu0 0
  %376 = vmatprep.subr.bf16.mxu0 0
  %377 = vmatpush1.bf16.msra.mxu0 0
  %378 = vmatprep.subr.bf16.mxu0 0
  %379 = vmatpush1.bf16.msra.mxu0 0
  %380 = vmatprep.subr.bf16.mxu0 0
  %381 = vmatpush1.bf16.msra.mxu0 0
  %382 = vmatprep.subr.bf16.mxu0 0
  %383 = vmatpush1.bf16.msra.mxu0 0
  %384 = vmatprep.subr.bf16.mxu0 0
  %385 = vmatpush1.bf16.msra.mxu0 0
  %386 = vmatprep.subr.bf16.mxu0 0
  %387 = vmatpush1.bf16.msra.mxu0 0
  %388 = vmatprep.subr.bf16.mxu0 0
  %389 = vmatpush1.bf16.msra.mxu0 0
  %390 = vmatprep.subr.bf16.mxu0 0
  %391 = vmatpush1.bf16.msra.mxu0 0
  %392 = vmatprep.subr.bf16.mxu0 0
  %393 = vmatpush1.bf16.msra.mxu0 0
  %394 = vmatprep.mubr.bf16.mxu0 0
  %395 = vmatmul.mubr.bf16.gmra.mrb[0].mxu0 %v360
  %v396 = vpop.f32.mrb[0].mxu0
  %v397 = vadd.f32 0.0, %v396
  %v398 = vpop.f32.mrb[0].mxu0
  %v399 = vpop.f32.mrb[0].mxu0
  %v400 = vadd.f32 0.0, %v399
  %v401 = vpop.f32.mrb[0].mxu0
  %402 = vdwg.mxu0
  %403 = vrot.lane.b32.xlu0 %v280, 120
  %v404 = vpop.permute.xlu0 %403
  %405 = vrot.lane.b32.xlu0 %v280, 88
  %v406 = vpop.permute.xlu0 %405
  %v408 = vsel %vm284, %v404, 0
  %v411 = vsel %vm284, %v406, 0
  %413 = vmatprep.subr.bf16.mxu0 0
  %414 = vmatpush1.bf16.xpose.msra.mxu0 %v411
  %415 = vmatprep.subr.bf16.mxu0 0
  %416 = vmatpush1.bf16.xpose.msra.mxu0 0
  %417 = vmatprep.subr.bf16.mxu0 0
  %418 = vmatpush1.bf16.xpose.msra.mxu0 0
  %419 = vmatprep.subr.bf16.mxu0 0
  %420 = vmatpush1.bf16.xpose.msra.mxu0 0
  %421 = vmatprep.subr.bf16.mxu0 0
  %422 = vmatpush1.bf16.xpose.msra.mxu0 0
  %423 = vmatprep.subr.bf16.mxu0 0
  %424 = vmatpush1.bf16.xpose.msra.mxu0 0
  %425 = vmatprep.subr.bf16.mxu0 0
  %426 = vmatpush1.bf16.xpose.msra.mxu0 0
  %427 = vmatprep.subr.bf16.mxu0 0
  %428 = vmatpush1.bf16.xpose.msra.mxu0 0
  %429 = vmatprep.subr.bf16.mxu0 0
  %430 = vmatpush1.bf16.xpose.msra.mxu0 0
  %431 = vmatprep.subr.bf16.mxu0 0
  %432 = vmatpush1.bf16.xpose.msra.mxu0 0
  %433 = vmatprep.subr.bf16.mxu0 0
  %434 = vmatpush1.bf16.xpose.msra.mxu0 0
  %435 = vmatprep.subr.bf16.mxu0 0
  %436 = vmatpush1.bf16.xpose.msra.mxu0 0
  %437 = vmatprep.subr.bf16.mxu0 0
  %438 = vmatpush1.bf16.xpose.msra.mxu0 0
  %439 = vmatprep.subr.bf16.mxu0 0
  %440 = vmatpush1.bf16.xpose.msra.mxu0 0
  %441 = vmatprep.subr.bf16.mxu0 0
  %442 = vmatpush1.bf16.xpose.msra.mxu0 0
  %443 = vmatprep.subr.bf16.mxu0 0
  %444 = vmatpush1.bf16.xpose.msra.mxu0 0
  %445 = vmatprep.mubr.bf16.mxu0 0
  %446 = vmatmul.mubr.bf16.gmra.mrb[0].mxu0 %v408
  %v447 = vpop.f32.mrb[0].mxu0
  %v448 = vadd.f32 %v212, %v447
  %v449 = vpop.f32.mrb[0].mxu0
  %v450 = vpop.f32.mrb[0].mxu0
  %v451 = vadd.f32 %v213, %v450
  %v452 = vpop.f32.mrb[0].mxu0
  %453 = vdwg.mxu0
  %v454 = vsel %vm332, %v448, -inf
  %455 = vmax.xlane.f32.xlu0 %v454
  %v456 = vpop.xlane.xlu0 %455
  %v457 = vsel %vm332, %v451, -inf
  %458 = vmax.xlane.f32.xlu0 %v457
  %v459 = vpop.xlane.xlu0 %458
  %v460 = vsub.f32 %v448, %v456
  %v461 = vsub.f32 %v451, %v459
  %v462 = vmul.f32 %v460, 1.442695
  %v463 = vpow.pop %v462
  %v464 = vmul.f32 %v461, 1.442695
  %v465 = vpow.pop %v464
  %v466 = vsel %vm332, %v463, 0.0
  %467 = vadd.xlane.f32.xlu0 %v466
  %v468 = vpop.xlane.xlu0 %467
  %v469 = vsel %vm332, %v465, 0.0
  %470 = vadd.xlane.f32.xlu0 %v469
  %v471 = vpop.xlane.xlu0 %470
  %v472 = vrcp.pop %v468
  %v473 = vrcp.pop %v471
  %v474 = vmul.f32 %v463, %v472
  %v475 = vmul.f32 %v465, %v473
  %v476 = vpack.c.bf16 %v475, %v474
  %477 = vrot.lane.b32.xlu0 %v280, 56
  %v478 = vpop.permute.xlu0 %477
  %v481 = vsel %vm332, %v476, 0
  %483 = vmatprep.subr.bf16.mxu0 0
  %484 = vmatpush1.bf16.msra.mxu0 %v478
  %485 = vmatprep.subr.bf16.mxu0 0
  %486 = vmatpush1.bf16.msra.mxu0 0
  %487 = vmatprep.subr.bf16.mxu0 0
  %488 = vmatpush1.bf16.msra.mxu0 0
  %489 = vmatprep.subr.bf16.mxu0 0
  %490 = vmatpush1.bf16.msra.mxu0 0
  %491 = vmatprep.subr.bf16.mxu0 0
  %492 = vmatpush1.bf16.msra.mxu0 0
  %493 = vmatprep.subr.bf16.mxu0 0
  %494 = vmatpush1.bf16.msra.mxu0 0
  %495 = vmatprep.subr.bf16.mxu0 0
  %496 = vmatpush1.bf16.msra.mxu0 0
  %497 = vmatprep.subr.bf16.mxu0 0
  %498 = vmatpush1.bf16.msra.mxu0 0
  %499 = vmatprep.subr.bf16.mxu0 0
  %500 = vmatpush1.bf16.msra.mxu0 0
  %501 = vmatprep.subr.bf16.mxu0 0
  %502 = vmatpush1.bf16.msra.mxu0 0
  %503 = vmatprep.subr.bf16.mxu0 0
  %504 = vmatpush1.bf16.msra.mxu0 0
  %505 = vmatprep.subr.bf16.mxu0 0
  %506 = vmatpush1.bf16.msra.mxu0 0
  %507 = vmatprep.subr.bf16.mxu0 0
  %508 = vmatpush1.bf16.msra.mxu0 0
  %509 = vmatprep.subr.bf16.mxu0 0
  %510 = vmatpush1.bf16.msra.mxu0 0
  %511 = vmatprep.subr.bf16.mxu0 0
  %512 = vmatpush1.bf16.msra.mxu0 0
  %513 = vmatprep.subr.bf16.mxu0 0
  %514 = vmatpush1.bf16.msra.mxu0 0
  %515 = vmatprep.mubr.bf16.mxu0 0
  %516 = vmatmul.mubr.bf16.gmra.mrb[0].mxu0 %v481
  %v517 = vpop.f32.mrb[0].mxu0
  %v518 = vadd.f32 0.0, %v517
  %v519 = vpop.f32.mrb[0].mxu0
  %v520 = vpop.f32.mrb[0].mxu0
  %v521 = vadd.f32 0.0, %v520
  %v522 = vpop.f32.mrb[0].mxu0
  %523 = vdwg.mxu0
  %524 = vrot.lane.b32.xlu0 %v280, 112
  %v525 = vpop.permute.xlu0 %524
  %526 = vrot.lane.b32.xlu0 %v280, 80
  %v527 = vpop.permute.xlu0 %526
  %v529 = vsel %vm284, %v525, 0
  %v532 = vsel %vm284, %v527, 0
  %534 = vmatprep.subr.bf16.mxu0 0
  %535 = vmatpush1.bf16.xpose.msra.mxu0 %v532
  %536 = vmatprep.subr.bf16.mxu0 0
  %537 = vmatpush1.bf16.xpose.msra.mxu0 0
  %538 = vmatprep.subr.bf16.mxu0 0
  %539 = vmatpush1.bf16.xpose.msra.mxu0 0
  %540 = vmatprep.subr.bf16.mxu0 0
  %541 = vmatpush1.bf16.xpose.msra.mxu0 0
  %542 = vmatprep.subr.bf16.mxu0 0
  %543 = vmatpush1.bf16.xpose.msra.mxu0 0
  %544 = vmatprep.subr.bf16.mxu0 0
  %545 = vmatpush1.bf16.xpose.msra.mxu0 0
  %546 = vmatprep.subr.bf16.mxu0 0
  %547 = vmatpush1.bf16.xpose.msra.mxu0 0
  %548 = vmatprep.subr.bf16.mxu0 0
  %549 = vmatpush1.bf16.xpose.msra.mxu0 0
  %550 = vmatprep.subr.bf16.mxu0 0
  %551 = vmatpush1.bf16.xpose.msra.mxu0 0
  %552 = vmatprep.subr.bf16.mxu0 0
  %553 = vmatpush1.bf16.xpose.msra.mxu0 0
  %554 = vmatprep.subr.bf16.mxu0 0
  %555 = vmatpush1.bf16.xpose.msra.mxu0 0
  %556 = vmatprep.subr.bf16.mxu0 0
  %557 = vmatpush1.bf16.xpose.msra.mxu0 0
  %558 = vmatprep.subr.bf16.mxu0 0
  %559 = vmatpush1.bf16.xpose.msra.mxu0 0
  %560 = vmatprep.subr.bf16.mxu0 0
  %561 = vmatpush1.bf16.xpose.msra.mxu0 0
  %562 = vmatprep.subr.bf16.mxu0 0
  %563 = vmatpush1.bf16.xpose.msra.mxu0 0
  %564 = vmatprep.subr.bf16.mxu0 0
  %565 = vmatpush1.bf16.xpose.msra.mxu0 0
  %566 = vmatprep.mubr.bf16.mxu0 0
  %567 = vmatmul.mubr.bf16.gmra.mrb[0].mxu0 %v529
  %v568 = vpop.f32.mrb[0].mxu0
  %v569 = vadd.f32 %v212, %v568
  %v570 = vpop.f32.mrb[0].mxu0
  %v571 = vpop.f32.mrb[0].mxu0
  %v572 = vadd.f32 %v213, %v571
  %v573 = vpop.f32.mrb[0].mxu0
  %574 = vdwg.mxu0
  %v575 = vsel %vm332, %v569, -inf
  %576 = vmax.xlane.f32.xlu0 %v575
  %v577 = vpop.xlane.xlu0 %576
  %v578 = vsel %vm332, %v572, -inf
  %579 = vmax.xlane.f32.xlu0 %v578
  %v580 = vpop.xlane.xlu0 %579
  %v581 = vsub.f32 %v569, %v577
  %v582 = vsub.f32 %v572, %v580
  %v583 = vmul.f32 %v581, 1.442695
  %v584 = vpow.pop %v583
  %v585 = vmul.f32 %v582, 1.442695
  %v586 = vpow.pop %v585
  %v587 = vsel %vm332, %v584, 0.0
  %588 = vadd.xlane.f32.xlu0 %v587
  %v589 = vpop.xlane.xlu0 %588
  %v590 = vsel %vm332, %v586, 0.0
  %591 = vadd.xlane.f32.xlu0 %v590
  %v592 = vpop.xlane.xlu0 %591
  %v593 = vrcp.pop %v589
  %v594 = vrcp.pop %v592
  %v595 = vmul.f32 %v584, %v593
  %v596 = vmul.f32 %v586, %v594
  %v597 = vpack.c.bf16 %v596, %v595
  %598 = vrot.lane.b32.xlu0 %v280, 48
  %v599 = vpop.permute.xlu0 %598
  %v602 = vsel %vm332, %v597, 0
  %604 = vmatprep.subr.bf16.mxu0 0
  %605 = vmatpush1.bf16.msra.mxu0 %v599
  %606 = vmatprep.subr.bf16.mxu0 0
  %607 = vmatpush1.bf16.msra.mxu0 0
  %608 = vmatprep.subr.bf16.mxu0 0
  %609 = vmatpush1.bf16.msra.mxu0 0
  %610 = vmatprep.subr.bf16.mxu0 0
  %611 = vmatpush1.bf16.msra.mxu0 0
  %612 = vmatprep.subr.bf16.mxu0 0
  %613 = vmatpush1.bf16.msra.mxu0 0
  %614 = vmatprep.subr.bf16.mxu0 0
  %615 = vmatpush1.bf16.msra.mxu0 0
  %616 = vmatprep.subr.bf16.mxu0 0
  %617 = vmatpush1.bf16.msra.mxu0 0
  %618 = vmatprep.subr.bf16.mxu0 0
  %619 = vmatpush1.bf16.msra.mxu0 0
  %620 = vmatprep.subr.bf16.mxu0 0
  %621 = vmatpush1.bf16.msra.mxu0 0
  %622 = vmatprep.subr.bf16.mxu0 0
  %623 = vmatpush1.bf16.msra.mxu0 0
  %624 = vmatprep.subr.bf16.mxu0 0
  %625 = vmatpush1.bf16.msra.mxu0 0
  %626 = vmatprep.subr.bf16.mxu0 0
  %627 = vmatpush1.bf16.msra.mxu0 0
  %628 = vmatprep.subr.bf16.mxu0 0
  %629 = vmatpush1.bf16.msra.mxu0 0
  %630 = vmatprep.subr.bf16.mxu0 0
  %631 = vmatpush1.bf16.msra.mxu0 0
  %632 = vmatprep.subr.bf16.mxu0 0
  %633 = vmatpush1.bf16.msra.mxu0 0
  %634 = vmatprep.subr.bf16.mxu0 0
  %635 = vmatpush1.bf16.msra.mxu0 0
  %636 = vmatprep.mubr.bf16.mxu0 0
  %637 = vmatmul.mubr.bf16.gmra.mrb[0].mxu0 %v602
  %v638 = vpop.f32.mrb[0].mxu0
  %v639 = vadd.f32 0.0, %v638
  %v640 = vpop.f32.mrb[0].mxu0
  %v641 = vpop.f32.mrb[0].mxu0
  %v642 = vadd.f32 0.0, %v641
  %v643 = vpop.f32.mrb[0].mxu0
  %644 = vdwg.mxu0
  %645 = vrot.lane.b32.xlu0 %v280, 104
  %v646 = vpop.permute.xlu0 %645
  %647 = vrot.lane.b32.xlu0 %v280, 72
  %v648 = vpop.permute.xlu0 %647
  %v650 = vsel %vm284, %v646, 0
  %v653 = vsel %vm284, %v648, 0
  %655 = vmatprep.subr.bf16.mxu0 0
  %656 = vmatpush1.bf16.xpose.msra.mxu0 %v653
  %657 = vmatprep.subr.bf16.mxu0 0
  %658 = vmatpush1.bf16.xpose.msra.mxu0 0
  %659 = vmatprep.subr.bf16.mxu0 0
  %660 = vmatpush1.bf16.xpose.msra.mxu0 0
  %661 = vmatprep.subr.bf16.mxu0 0
  %662 = vmatpush1.bf16.xpose.msra.mxu0 0
  %663 = vmatprep.subr.bf16.mxu0 0
  %664 = vmatpush1.bf16.xpose.msra.mxu0 0
  %665 = vmatprep.subr.bf16.mxu0 0
  %666 = vmatpush1.bf16.xpose.msra.mxu0 0
  %667 = vmatprep.subr.bf16.mxu0 0
  %668 = vmatpush1.bf16.xpose.msra.mxu0 0
  %669 = vmatprep.subr.bf16.mxu0 0
  %670 = vmatpush1.bf16.xpose.msra.mxu0 0
  %671 = vmatprep.subr.bf16.mxu0 0
  %672 = vmatpush1.bf16.xpose.msra.mxu0 0
  %673 = vmatprep.subr.bf16.mxu0 0
  %674 = vmatpush1.bf16.xpose.msra.mxu0 0
  %675 = vmatprep.subr.bf16.mxu0 0
  %676 = vmatpush1.bf16.xpose.msra.mxu0 0
  %677 = vmatprep.subr.bf16.mxu0 0
  %678 = vmatpush1.bf16.xpose.msra.mxu0 0
  %679 = vmatprep.subr.bf16.mxu0 0
  %680 = vmatpush1.bf16.xpose.msra.mxu0 0
  %681 = vmatprep.subr.bf16.mxu0 0
  %682 = vmatpush1.bf16.xpose.msra.mxu0 0
  %683 = vmatprep.subr.bf16.mxu0 0
  %684 = vmatpush1.bf16.xpose.msra.mxu0 0
  %685 = vmatprep.subr.bf16.mxu0 0
  %686 = vmatpush1.bf16.xpose.msra.mxu0 0
  %687 = vmatprep.mubr.bf16.mxu0 0
  %688 = vmatmul.mubr.bf16.gmra.mrb[0].mxu0 %v650
  %v689 = vpop.f32.mrb[0].mxu0
  %v690 = vadd.f32 %v212, %v689
  %v691 = vpop.f32.mrb[0].mxu0
  %v692 = vpop.f32.mrb[0].mxu0
  %v693 = vadd.f32 %v213, %v692
  %v694 = vpop.f32.mrb[0].mxu0
  %695 = vdwg.mxu0
  %v696 = vsel %vm332, %v690, -inf
  %697 = vmax.xlane.f32.xlu0 %v696
  %v698 = vpop.xlane.xlu0 %697
  %v699 = vsel %vm332, %v693, -inf
  %700 = vmax.xlane.f32.xlu0 %v699
  %v701 = vpop.xlane.xlu0 %700
  %v702 = vsub.f32 %v690, %v698
  %v703 = vsub.f32 %v693, %v701
  %v704 = vmul.f32 %v702, 1.442695
  %v705 = vpow.pop %v704
  %v706 = vmul.f32 %v703, 1.442695
  %v707 = vpow.pop %v706
  %v708 = vsel %vm332, %v705, 0.0
  %709 = vadd.xlane.f32.xlu0 %v708
  %v710 = vpop.xlane.xlu0 %709
  %v711 = vsel %vm332, %v707, 0.0
  %712 = vadd.xlane.f32.xlu0 %v711
  %v713 = vpop.xlane.xlu0 %712
  %v714 = vrcp.pop %v710
  %v715 = vrcp.pop %v713
  %v716 = vmul.f32 %v705, %v714
  %v717 = vmul.f32 %v707, %v715
  %v718 = vpack.c.bf16 %v717, %v716
  %719 = vrot.lane.b32.xlu0 %v280, 40
  %v720 = vpop.permute.xlu0 %719
  %v723 = vsel %vm332, %v718, 0
  %725 = vmatprep.subr.bf16.mxu0 0
  %726 = vmatpush1.bf16.msra.mxu0 %v720
  %727 = vmatprep.subr.bf16.mxu0 0
  %728 = vmatpush1.bf16.msra.mxu0 0
  %729 = vmatprep.subr.bf16.mxu0 0
  %730 = vmatpush1.bf16.msra.mxu0 0
  %731 = vmatprep.subr.bf16.mxu0 0
  %732 = vmatpush1.bf16.msra.mxu0 0
  %733 = vmatprep.subr.bf16.mxu0 0
  %734 = vmatpush1.bf16.msra.mxu0 0
  %735 = vmatprep.subr.bf16.mxu0 0
  %736 = vmatpush1.bf16.msra.mxu0 0
  %737 = vmatprep.subr.bf16.mxu0 0
  %738 = vmatpush1.bf16.msra.mxu0 0
  %739 = vmatprep.subr.bf16.mxu0 0
  %740 = vmatpush1.bf16.msra.mxu0 0
  %741 = vmatprep.subr.bf16.mxu0 0
  %742 = vmatpush1.bf16.msra.mxu0 0
  %743 = vmatprep.subr.bf16.mxu0 0
  %744 = vmatpush1.bf16.msra.mxu0 0
  %745 = vmatprep.subr.bf16.mxu0 0
  %746 = vmatpush1.bf16.msra.mxu0 0
  %747 = vmatprep.subr.bf16.mxu0 0
  %748 = vmatpush1.bf16.msra.mxu0 0
  %749 = vmatprep.subr.bf16.mxu0 0
  %750 = vmatpush1.bf16.msra.mxu0 0
  %751 = vmatprep.subr.bf16.mxu0 0
  %752 = vmatpush1.bf16.msra.mxu0 0
  %753 = vmatprep.subr.bf16.mxu0 0
  %754 = vmatpush1.bf16.msra.mxu0 0
  %755 = vmatprep.subr.bf16.mxu0 0
  %756 = vmatpush1.bf16.msra.mxu0 0
  %757 = vmatprep.mubr.bf16.mxu0 0
  %758 = vmatmul.mubr.bf16.gmra.mrb[0].mxu0 %v723
  %v759 = vpop.f32.mrb[0].mxu0
  %v760 = vadd.f32 0.0, %v759
  %v761 = vpop.f32.mrb[0].mxu0
  %v762 = vpop.f32.mrb[0].mxu0
  %v763 = vadd.f32 0.0, %v762
  %v764 = vpop.f32.mrb[0].mxu0
  %765 = vdwg.mxu0
  %768 = vrot.lane.b32.xlu0 %v518, 8
  %v769 = vpop.permute.xlu0 %768
  %770 = vrot.lane.b32.xlu0 %v521, 8
  %v771 = vpop.permute.xlu0 %770
  %776 = vrot.lane.b32.xlu0 %v639, 16
  %v777 = vpop.permute.xlu0 %776
  %778 = vrot.lane.b32.xlu0 %v642, 16
  %v779 = vpop.permute.xlu0 %778
  %784 = vrot.lane.b32.xlu0 %v760, 24
  %v785 = vpop.permute.xlu0 %784
  %786 = vrot.lane.b32.xlu0 %v763, 24
  %v787 = vpop.permute.xlu0 %786
  %v790 = vsel %vm284, %v397, %v769
  %v791 = vsel %vm284, %v400, %v771
  %v792 = vsel %vm332, %v790, %v777
  %v793 = vsel %vm332, %v791, %v779
  %vm794 = vcmask 195584
  %v795 = vsel %vm794, %v792, %v785
  %v796 = vsel %vm794, %v793, %v787
  %v797 = vpack.c.bf16 %v796, %v795
  %v798 = vlaneseq
  %v799 = vshrl.u32 %v798, 7
  %v800 = vsub.s32 1, %v799
  %v801 = vrot.slane %v218, %v800
  %802 = vrot.lane.b32.xlu0 %v232, 32
  %v803 = vpop.permute.xlu0 %802
  %804 = vrot.lane.b32.xlu0 %v233, 32
  %v805 = vpop.permute.xlu0 %804
  %v809 = vsel %vm172, %v797, 0
  %811 = vmatprep.subr.bf16.mxu0 0
  %812 = vmatpush1.bf16.msra.mxu0 %v803
  %813 = vmatprep.subr.bf16.mxu0 0
  %814 = vmatpush1.bf16.msra.mxu0 %v805
  %815 = vmatprep.subr.bf16.mxu0 0
  %816 = vmatpush1.bf16.msra.mxu0 0
  %817 = vmatprep.subr.bf16.mxu0 0
  %818 = vmatpush1.bf16.msra.mxu0 0
  %819 = vmatprep.subr.bf16.mxu0 0
  %820 = vmatpush1.bf16.msra.mxu0 0
  %821 = vmatprep.subr.bf16.mxu0 0
  %822 = vmatpush1.bf16.msra.mxu0 0
  %823 = vmatprep.subr.bf16.mxu0 0
  %824 = vmatpush1.bf16.msra.mxu0 0
  %825 = vmatprep.subr.bf16.mxu0 0
  %826 = vmatpush1.bf16.msra.mxu0 0
  %827 = vmatprep.subr.bf16.mxu0 0
  %828 = vmatpush1.bf16.msra.mxu0 0
  %829 = vmatprep.subr.bf16.mxu0 0
  %830 = vmatpush1.bf16.msra.mxu0 0
  %831 = vmatprep.subr.bf16.mxu0 0
  %832 = vmatpush1.bf16.msra.mxu0 0
  %833 = vmatprep.subr.bf16.mxu0 0
  %834 = vmatpush1.bf16.msra.mxu0 0
  %835 = vmatprep.subr.bf16.mxu0 0
  %836 = vmatpush1.bf16.msra.mxu0 0
  %837 = vmatprep.subr.bf16.mxu0 0
  %838 = vmatpush1.bf16.msra.mxu0 0
  %839 = vmatprep.subr.bf16.mxu0 0
  %840 = vmatpush1.bf16.msra.mxu0 0
  %841 = vmatprep.subr.bf16.mxu0 0
  %842 = vmatpush1.bf16.msra.mxu0 0
  %843 = vmatprep.mubr.bf16.mxu0 0
  %844 = vmatmul.mubr.bf16.gmra.mrb[0].mxu0 %v809
  %v845 = vpop.f32.mrb[0].mxu0
  %v846 = vadd.f32 %v801, %v845
  %v847 = vpop.f32.mrb[0].mxu0
  %v848 = vpop.f32.mrb[0].mxu0
  %v849 = vadd.f32 %v801, %v848
  %v850 = vpop.f32.mrb[0].mxu0
  %851 = vdwg.mxu0
  %v852 = vadd.f32 %v846, %v210
  %v853 = vadd.f32 %v849, %v211
  %v854 = vsel %vm172, %v852, 0.0
  %855 = vadd.xlane.f32.xlu0 %v854
  %v856 = vpop.xlane.xlu0 %855
  %v857 = vsel %vm172, %v853, 0.0
  %858 = vadd.xlane.f32.xlu0 %v857
  %v859 = vpop.xlane.xlu0 %858
  %v860 = vmul.f32 %v856, %v179
  %v861 = vmul.f32 %v859, %v179
  %v862 = vsub.f32 %v852, %v860
  %v863 = vsub.f32 %v853, %v861
  %v864 = vmul.f32 %v862, %v862
  %v865 = vmul.f32 %v863, %v863
  %v866 = vsel %vm172, %v864, 0.0
  %867 = vadd.xlane.f32.xlu0 %v866
  %v868 = vpop.xlane.xlu0 %867
  %v869 = vsel %vm172, %v865, 0.0
  %870 = vadd.xlane.f32.xlu0 %v869
  %v871 = vpop.xlane.xlu0 %870
  %v872 = vmul.f32 %v868, %v179
  %v873 = vmul.f32 %v871, %v179
  %v874 = vadd.f32 %v872, 1e-05
  %v875 = vadd.f32 %v873, 1e-05
  %v876 = vrsqrt.pop %v874
  %v877 = vrsqrt.pop %v875
  %v878 = vmul.f32 %v862, %v876
  %v879 = vmul.f32 %v863, %v877
  %v880 = vlaneseq
  %v881 = vshrl.u32 %v880, 7
  %v882 = vsub.s32 2, %v881
  %v883 = vrot.slane %v218, %v882
  %v884 = vmul.f32 %v878, %v883
  %v885 = vmul.f32 %v879, %v883
  %v886 = vlaneseq
  %v887 = vshrl.u32 %v886, 7
  %v888 = vsub.s32 3, %v887
  %v889 = vrot.slane %v218, %v888
  %v890 = vadd.f32 %v884, %v889
  %v891 = vadd.f32 %v885, %v889
  %v892 = vpack.c.bf16 %v891, %v890
  %v893 = vlaneseq
  %v894 = vshrl.u32 %v893, 7
  %v895 = vsub.s32 4, %v894
  %v896 = vrot.slane %v218, %v895
  %v897 = vunpack.c.h.b16 %v214
  %v898 = vunpack.c.h.b16 %v215
  %v899 = vunpack.c.h.b16 %v216
  %v900 = vunpack.c.h.b16 %v217
  %v901 = vpack.c.b16 %v898, %v897
  %v902 = vpack.c.b16 %v900, %v899
  %v906 = vsel %vm172, %v892, 0
  %908 = vmatprep.subr.bf16.mxu0 0
  %909 = vmatpush1.bf16.msra.mxu0 %v901
  %910 = vmatprep.subr.bf16.mxu0 0
  %911 = vmatpush1.bf16.msra.mxu0 %v902
  %912 = vmatprep.subr.bf16.mxu0 0
  %913 = vmatpush1.bf16.msra.mxu0 0
  %914 = vmatprep.subr.bf16.mxu0 0
  %915 = vmatpush1.bf16.msra.mxu0 0
  %916 = vmatprep.subr.bf16.mxu0 0
  %917 = vmatpush1.bf16.msra.mxu0 0
  %918 = vmatprep.subr.bf16.mxu0 0
  %919 = vmatpush1.bf16.msra.mxu0 0
  %920 = vmatprep.subr.bf16.mxu0 0
  %921 = vmatpush1.bf16.msra.mxu0 0
  %922 = vmatprep.subr.bf16.mxu0 0
  %923 = vmatpush1.bf16.msra.mxu0 0
  %924 = vmatprep.subr.bf16.mxu0 0
  %925 = vmatpush1.bf16.msra.mxu0 0
  %926 = vmatprep.subr.bf16.mxu0 0
  %927 = vmatpush1.bf16.msra.mxu0 0
  %928 = vmatprep.subr.bf16.mxu0 0
  %929 = vmatpush1.bf16.msra.mxu0 0
  %930 = vmatprep.subr.bf16.mxu0 0
  %931 = vmatpush1.bf16.msra.mxu0 0
  %932 = vmatprep.subr.bf16.mxu0 0
  %933 = vmatpush1.bf16.msra.mxu0 0
  %934 = vmatprep.subr.bf16.mxu0 0
  %935 = vmatpush1.bf16.msra.mxu0 0
  %936 = vmatprep.subr.bf16.mxu0 0
  %937 = vmatpush1.bf16.msra.mxu0 0
  %938 = vmatprep.subr.bf16.mxu0 0
  %939 = vmatpush1.bf16.msra.mxu0 0
  %940 = vmatprep.mubr.bf16.mxu0 0
  %941 = vmatmul.mubr.bf16.gmra.mrb[0].mxu0 %v906
  %v942 = vpop.f32.mrb[0].mxu0
  %v943 = vadd.f32 %v896, %v942
  %v944 = vpop.f32.mrb[0].mxu0
  %v945 = vpop.f32.mrb[0].mxu0
  %v946 = vadd.f32 %v896, %v945
  %v947 = vpop.f32.mrb[0].mxu0
  %948 = vdwg.mxu0
  %v949 = vmul.f32 %v943, 0.5
  %v950 = vmul.f32 %v946, 0.5
  %v951 = vmul.f32 %v943, 0.044715
  %v952 = vmul.f32 %v946, 0.044715
  %v953 = vmul.f32 %v951, %v943
  %v954 = vmul.f32 %v952, %v946
  %v955 = vmul.f32 %v953, %v943
  %v956 = vmul.f32 %v954, %v946
  %v957 = vadd.f32 %v943, %v955
  %v958 = vadd.f32 %v946, %v956
  %v959 = vmul.f32 %v957, 0.7978846
  %v960 = vmul.f32 %v958, 0.7978846
  %v961 = vtanh.pop %v959
  %v962 = vtanh.pop %v960
  %v963 = vadd.f32 %v961, 1.0
  %v964 = vadd.f32 %v962, 1.0
  %v965 = vmul.f32 %v949, %v963
  %v966 = vmul.f32 %v950, %v964
  %v967 = vld [vmem:[%s5] sm:$0xf]
  %v968 = vld [vmem:[%s5 + $0x4] sm:$0xf]
  %v969 = vld [vmem:[%s5 + $0x8] sm:$0xf]
  %v970 = vld [vmem:[%s5 + $0xc] sm:$0xf]
  %v971 = vld [vmem:[%s5 + $0x10] sm:$0xf]
  %v972 = vld [vmem:[%s5 + $0x14] sm:$0xf]
  %v973 = vld [vmem:[%s5 + $0x18] sm:$0xf]
  %v974 = vld [vmem:[%s5 + $0x1c] sm:$0xf]
  %v975 = vpack.c.bf16 %v966, %v965
  %v976 = vlaneseq
  %v977 = vshrl.u32 %v976, 7
  %v978 = vsub.s32 5, %v977
  %v979 = vrot.slane %v218, %v978
  %v988 = vunpack.c.l.b16 %v967
  %v989 = vunpack.c.l.b16 %v968
  %v990 = vunpack.c.l.b16 %v969
  %v991 = vunpack.c.l.b16 %v970
  %v992 = vunpack.c.l.b16 %v971
  %v993 = vunpack.c.l.b16 %v972
  %v994 = vunpack.c.l.b16 %v973
  %v995 = vunpack.c.l.b16 %v974
  %v996 = vpack.c.b16 %v989, %v988
  %v997 = vpack.c.b16 %v991, %v990
  %v998 = vpack.c.b16 %v993, %v992
  %v999 = vpack.c.b16 %v995, %v994
  %vm1004 = vcmask 523264
  %v1006 = vsel %vm1004, %v975, 0
  %1008 = vmatprep.subr.bf16.mxu0 0
  %1009 = vmatpush1.bf16.msra.mxu0 %v996
  %1010 = vmatprep.subr.bf16.mxu0 0
  %1011 = vmatpush1.bf16.msra.mxu0 %v997
  %1012 = vmatprep.subr.bf16.mxu0 0
  %1013 = vmatpush1.bf16.msra.mxu0 %v998
  %1014 = vmatprep.subr.bf16.mxu0 0
  %1015 = vmatpush1.bf16.msra.mxu0 %v999
  %1016 = vmatprep.subr.bf16.mxu0 0
  %1017 = vmatpush1.bf16.msra.mxu0 0
  %1018 = vmatprep.subr.bf16.mxu0 0
  %1019 = vmatpush1.bf16.msra.mxu0 0
  %1020 = vmatprep.subr.bf16.mxu0 0
  %1021 = vmatpush1.bf16.msra.mxu0 0
  %1022 = vmatprep.subr.bf16.mxu0 0
  %1023 = vmatpush1.bf16.msra.mxu0 0
  %1024 = vmatprep.subr.bf16.mxu0 0
  %1025 = vmatpush1.bf16.msra.mxu0 0
  %1026 = vmatprep.subr.bf16.mxu0 0
  %1027 = vmatpush1.bf16.msra.mxu0 0
  %1028 = vmatprep.subr.bf16.mxu0 0
  %1029 = vmatpush1.bf16.msra.mxu0 0
  %1030 = vmatprep.subr.bf16.mxu0 0
  %1031 = vmatpush1.bf16.msra.mxu0 0
  %1032 = vmatprep.subr.bf16.mxu0 0
  %1033 = vmatpush1.bf16.msra.mxu0 0
  %1034 = vmatprep.subr.bf16.mxu0 0
  %1035 = vmatpush1.bf16.msra.mxu0 0
  %1036 = vmatprep.subr.bf16.mxu0 0
  %1037 = vmatpush1.bf16.msra.mxu0 0
  %1038 = vmatprep.subr.bf16.mxu0 0
  %1039 = vmatpush1.bf16.msra.mxu0 0
  %1040 = vmatprep.mubr.bf16.mxu0 0
  %1041 = vmatmul.mubr.bf16.gmra.mrb[0].mxu0 %v1006
  %v1042 = vpop.f32.mrb[0].mxu0
  %v1043 = vadd.f32 %v979, %v1042
  %v1044 = vpop.f32.mrb[0].mxu0
  %v1045 = vpop.f32.mrb[0].mxu0
  %v1046 = vadd.f32 %v979, %v1045
  %v1047 = vpop.f32.mrb[0].mxu0
  %1048 = vdwg.mxu0
  %v1049 = vadd.f32 %v1043, %v890
  %v1050 = vadd.f32 %v1046, %v891
  %v1051 = vsel %vm172, %v1049, 0.0
  %1052 = vadd.xlane.f32.xlu0 %v1051
  %v1053 = vpop.xlane.xlu0 %1052
  %v1054 = vsel %vm172, %v1050, 0.0
  %1055 = vadd.xlane.f32.xlu0 %v1054
  %v1056 = vpop.xlane.xlu0 %1055
  %v1057 = vmul.f32 %v1053, %v179
  %v1058 = vmul.f32 %v1056, %v179
  %v1059 = vsub.f32 %v1049, %v1057
  %v1060 = vsub.f32 %v1050, %v1058
  %v1061 = vmul.f32 %v1059, %v1059
  %v1062 = vmul.f32 %v1060, %v1060
  %v1063 = vsel %vm172, %v1061, 0.0
  %1064 = vadd.xlane.f32.xlu0 %v1063
  %v1065 = vpop.xlane.xlu0 %1064
  %v1066 = vsel %vm172, %v1062, 0.0
  %1067 = vadd.xlane.f32.xlu0 %v1066
  %v1068 = vpop.xlane.xlu0 %1067
  %v1069 = vmul.f32 %v1065, %v179
  %v1070 = vmul.f32 %v1068, %v179
  %v1071 = vadd.f32 %v1069, 1e-05
  %v1072 = vadd.f32 %v1070, 1e-05
  %v1073 = vrsqrt.pop %v1071
  %v1074 = vrsqrt.pop %v1072
  %v1075 = vmul.f32 %v1059, %v1073
  %v1076 = vmul.f32 %v1060, %v1074
  %v1077 = vlaneseq
  %v1078 = vshrl.u32 %v1077, 7
  %v1079 = vsub.s32 6, %v1078
  %v1080 = vrot.slane %v218, %v1079
  %v1081 = vmul.f32 %v1075, %v1080
  %v1082 = vmul.f32 %v1076, %v1080
  %v1083 = vlaneseq
  %v1084 = vshrl.u32 %v1083, 7
  %v1085 = vsub.s32 7, %v1084
  %v1086 = vrot.slane %v218, %v1085
  %v1087 = vadd.f32 %v1081, %v1086
  %v1088 = vadd.f32 %v1082, %v1086
  %s1089 = scalar_lea.vmem %s4, 32
  %v1090 = vld [vmem:[%s1089] sm:$0xff]
  %v1091 = vld [vmem:[%s1089 + $0x8] sm:$0xff]
  %v1092 = vld [vmem:[%s1089 + $0x10] sm:$0xff]
  %v1093 = vld [vmem:[%s1089 + $0x18] sm:$0xff]
  %s1094 = scalar_lea.vmem %s7, 8
  %v1095 = vld [vmem:[%s1094] sm:$0xff]
  %v1096 = vpack.c.bf16 %v1088, %v1087
  %v1097 = vlaneseq
  %v1098 = vshrl.u32 %v1097, 7
  %v1099 = vsub.s32 0, %v1098
  %v1100 = vrot.slane %v1095, %v1099
  %v1105 = vunpack.c.l.b16 %v1090
  %v1106 = vunpack.c.l.b16 %v1091
  %v1107 = vunpack.c.l.b16 %v1092
  %v1108 = vunpack.c.l.b16 %v1093
  %v1109 = vpack.c.b16 %v1106, %v1105
  %v1110 = vpack.c.b16 %v1108, %v1107
  %v1114 = vsel %vm172, %v1096, 0
  %1116 = vmatprep.subr.bf16.mxu0 0
  %1117 = vmatpush1.bf16.msra.mxu0 %v1109
  %1118 = vmatprep.subr.bf16.mxu0 0
  %1119 = vmatpush1.bf16.msra.mxu0 %v1110
  %1120 = vmatprep.subr.bf16.mxu0 0
  %1121 = vmatpush1.bf16.msra.mxu0 0
  %1122 = vmatprep.subr.bf16.mxu0 0
  %1123 = vmatpush1.bf16.msra.mxu0 0
  %1124 = vmatprep.subr.bf16.mxu0 0
  %1125 = vmatpush1.bf16.msra.mxu0 0
  %1126 = vmatprep.subr.bf16.mxu0 0
  %1127 = vmatpush1.bf16.msra.mxu0 0
  %1128 = vmatprep.subr.bf16.mxu0 0
  %1129 = vmatpush1.bf16.msra.mxu0 0
  %1130 = vmatprep.subr.bf16.mxu0 0
  %1131 = vmatpush1.bf16.msra.mxu0 0
  %1132 = vmatprep.subr.bf16.mxu0 0
  %1133 = vmatpush1.bf16.msra.mxu0 0
  %1134 = vmatprep.subr.bf16.mxu0 0
  %1135 = vmatpush1.bf16.msra.mxu0 0
  %1136 = vmatprep.subr.bf16.mxu0 0
  %1137 = vmatpush1.bf16.msra.mxu0 0
  %1138 = vmatprep.subr.bf16.mxu0 0
  %1139 = vmatpush1.bf16.msra.mxu0 0
  %1140 = vmatprep.subr.bf16.mxu0 0
  %1141 = vmatpush1.bf16.msra.mxu0 0
  %1142 = vmatprep.subr.bf16.mxu0 0
  %1143 = vmatpush1.bf16.msra.mxu0 0
  %1144 = vmatprep.subr.bf16.mxu0 0
  %1145 = vmatpush1.bf16.msra.mxu0 0
  %1146 = vmatprep.subr.bf16.mxu0 0
  %1147 = vmatpush1.bf16.msra.mxu0 0
  %1148 = vmatprep.mubr.bf16.mxu0 0
  %1149 = vmatmul.mubr.bf16.gmra.mrb[0].mxu0 %v1114
  %v1150 = vpop.f32.mrb[0].mxu0
  %v1151 = vadd.f32 %v1100, %v1150
  %v1152 = vpop.f32.mrb[0].mxu0
  %v1153 = vpop.f32.mrb[0].mxu0
  %v1154 = vadd.f32 %v1100, %v1153
  %v1155 = vpop.f32.mrb[0].mxu0
  %1156 = vdwg.mxu0
  %v1157 = vpack.c.bf16 %v1154, %v1151
  %1159 = vrot.lane.b32.xlu0 %v1157, 96
  %v1160 = vpop.permute.xlu0 %1159
  %v1162 = vsel %vm284, %v1157, 0
  %v1165 = vsel %vm284, %v1160, 0
  %1167 = vmatprep.subr.bf16.mxu0 0
  %1168 = vmatpush1.bf16.xpose.msra.mxu0 %v1165
  %1169 = vmatprep.subr.bf16.mxu0 0
  %1170 = vmatpush1.bf16.xpose.msra.mxu0 0
  %1171 = vmatprep.subr.bf16.mxu0 0
  %1172 = vmatpush1.bf16.xpose.msra.mxu0 0
  %1173 = vmatprep.subr.bf16.mxu0 0
  %1174 = vmatpush1.bf16.xpose.msra.mxu0 0
  %1175 = vmatprep.subr.bf16.mxu0 0
  %1176 = vmatpush1.bf16.xpose.msra.mxu0 0
  %1177 = vmatprep.subr.bf16.mxu0 0
  %1178 = vmatpush1.bf16.xpose.msra.mxu0 0
  %1179 = vmatprep.subr.bf16.mxu0 0
  %1180 = vmatpush1.bf16.xpose.msra.mxu0 0
  %1181 = vmatprep.subr.bf16.mxu0 0
  %1182 = vmatpush1.bf16.xpose.msra.mxu0 0
  %1183 = vmatprep.subr.bf16.mxu0 0
  %1184 = vmatpush1.bf16.xpose.msra.mxu0 0
  %1185 = vmatprep.subr.bf16.mxu0 0
  %1186 = vmatpush1.bf16.xpose.msra.mxu0 0
  %1187 = vmatprep.subr.bf16.mxu0 0
  %1188 = vmatpush1.bf16.xpose.msra.mxu0 0
  %1189 = vmatprep.subr.bf16.mxu0 0
  %1190 = vmatpush1.bf16.xpose.msra.mxu0 0
  %1191 = vmatprep.subr.bf16.mxu0 0
  %1192 = vmatpush1.bf16.xpose.msra.mxu0 0
  %1193 = vmatprep.subr.bf16.mxu0 0
  %1194 = vmatpush1.bf16.xpose.msra.mxu0 0
  %1195 = vmatprep.subr.bf16.mxu0 0
  %1196 = vmatpush1.bf16.xpose.msra.mxu0 0
  %1197 = vmatprep.subr.bf16.mxu0 0
  %1198 = vmatpush1.bf16.xpose.msra.mxu0 0
  %1199 = vmatprep.mubr.bf16.mxu0 0
  %1200 = vmatmul.mubr.bf16.gmra.mrb[0].mxu0 %v1162
  %v1201 = vpop.f32.mrb[0].mxu0
  %v1202 = vadd.f32 %v212, %v1201
  %v1203 = vpop.f32.mrb[0].mxu0
  %v1204 = vpop.f32.mrb[0].mxu0
  %v1205 = vadd.f32 %v213, %v1204
  %v1206 = vpop.f32.mrb[0].mxu0
  %1207 = vdwg.mxu0
  %v1208 = vsel %vm332, %v1202, -inf
  %1209 = vmax.xlane.f32.xlu0 %v1208
  %v1210 = vpop.xlane.xlu0 %1209
  %v1211 = vsel %vm332, %v1205, -inf
  %1212 = vmax.xlane.f32.xlu0 %v1211
  %v1213 = vpop.xlane.xlu0 %1212
  %v1214 = vsub.f32 %v1202, %v1210
  %v1215 = vsub.f32 %v1205, %v1213
  %v1216 = vmul.f32 %v1214, 1.442695
  %v1217 = vpow.pop %v1216
  %v1218 = vmul.f32 %v1215, 1.442695
  %v1219 = vpow.pop %v1218
  %v1220 = vsel %vm332, %v1217, 0.0
  %1221 = vadd.xlane.f32.xlu0 %v1220
  %v1222 = vpop.xlane.xlu0 %1221
  %v1223 = vsel %vm332, %v1219, 0.0
  %1224 = vadd.xlane.f32.xlu0 %v1223
  %v1225 = vpop.xlane.xlu0 %1224
  %v1226 = vrcp.pop %v1222
  %v1227 = vrcp.pop %v1225
  %v1228 = vmul.f32 %v1217, %v1226
  %v1229 = vmul.f32 %v1219, %v1227
  %v1230 = vpack.c.bf16 %v1229, %v1228
  %1231 = vrot.lane.b32.xlu0 %v1157, 64
  %v1232 = vpop.permute.xlu0 %1231
  %v1235 = vsel %vm332, %v1230, 0
  %1237 = vmatprep.subr.bf16.mxu0 0
  %1238 = vmatpush1.bf16.msra.mxu0 %v1232
  %1239 = vmatprep.subr.bf16.mxu0 0
  %1240 = vmatpush1.bf16.msra.mxu0 0
  %1241 = vmatprep.subr.bf16.mxu0 0
  %1242 = vmatpush1.bf16.msra.mxu0 0
  %1243 = vmatprep.subr.bf16.mxu0 0
  %1244 = vmatpush1.bf16.msra.mxu0 0
  %1245 = vmatprep.subr.bf16.mxu0 0
  %1246 = vmatpush1.bf16.msra.mxu0 0
  %1247 = vmatprep.subr.bf16.mxu0 0
  %1248 = vmatpush1.bf16.msra.mxu0 0
  %1249 = vmatprep.subr.bf16.mxu0 0
  %1250 = vmatpush1.bf16.msra.mxu0 0
  %1251 = vmatprep.subr.bf16.mxu0 0
  %1252 = vmatpush1.bf16.msra.mxu0 0
  %1253 = vmatprep.subr.bf16.mxu0 0
  %1254 = vmatpush1.bf16.msra.mxu0 0
  %1255 = vmatprep.subr.bf16.mxu0 0
  %1256 = vmatpush1.bf16.msra.mxu0 0
  %1257 = vmatprep.subr.bf16.mxu0 0
  %1258 = vmatpush1.bf16.msra.mxu0 0
  %1259 = vmatprep.subr.bf16.mxu0 0
  %1260 = vmatpush1.bf16.msra.mxu0 0
  %1261 = vmatprep.subr.bf16.mxu0 0
  %1262 = vmatpush1.bf16.msra.mxu0 0
  %1263 = vmatprep.subr.bf16.mxu0 0
  %1264 = vmatpush1.bf16.msra.mxu0 0
  %1265 = vmatprep.subr.bf16.mxu0 0
  %1266 = vmatpush1.bf16.msra.mxu0 0
  %1267 = vmatprep.subr.bf16.mxu0 0
  %1268 = vmatpush1.bf16.msra.mxu0 0
  %1269 = vmatprep.mubr.bf16.mxu0 0
  %1270 = vmatmul.mubr.bf16.gmra.mrb[0].mxu0 %v1235
  %v1271 = vpop.f32.mrb[0].mxu0
  %v1272 = vadd.f32 0.0, %v1271
  %v1273 = vpop.f32.mrb[0].mxu0
  %v1274 = vpop.f32.mrb[0].mxu0
  %v1275 = vadd.f32 0.0, %v1274
  %v1276 = vpop.f32.mrb[0].mxu0
  %1277 = vdwg.mxu0
  %1278 = vrot.lane.b32.xlu0 %v1157, 120
  %v1279 = vpop.permute.xlu0 %1278
  %1280 = vrot.lane.b32.xlu0 %v1157, 88
  %v1281 = vpop.permute.xlu0 %1280
  %v1283 = vsel %vm284, %v1279, 0
  %v1286 = vsel %vm284, %v1281, 0
  %1288 = vmatprep.subr.bf16.mxu0 0
  %1289 = vmatpush1.bf16.xpose.msra.mxu0 %v1286
  %1290 = vmatprep.subr.bf16.mxu0 0
  %1291 = vmatpush1.bf16.xpose.msra.mxu0 0
  %1292 = vmatprep.subr.bf16.mxu0 0
  %1293 = vmatpush1.bf16.xpose.msra.mxu0 0
  %1294 = vmatprep.subr.bf16.mxu0 0
  %1295 = vmatpush1.bf16.xpose.msra.mxu0 0
  %1296 = vmatprep.subr.bf16.mxu0 0
  %1297 = vmatpush1.bf16.xpose.msra.mxu0 0
  %1298 = vmatprep.subr.bf16.mxu0 0
  %1299 = vmatpush1.bf16.xpose.msra.mxu0 0
  %1300 = vmatprep.subr.bf16.mxu0 0
  %1301 = vmatpush1.bf16.xpose.msra.mxu0 0
  %1302 = vmatprep.subr.bf16.mxu0 0
  %1303 = vmatpush1.bf16.xpose.msra.mxu0 0
  %1304 = vmatprep.subr.bf16.mxu0 0
  %1305 = vmatpush1.bf16.xpose.msra.mxu0 0
  %1306 = vmatprep.subr.bf16.mxu0 0
  %1307 = vmatpush1.bf16.xpose.msra.mxu0 0
  %1308 = vmatprep.subr.bf16.mxu0 0
  %1309 = vmatpush1.bf16.xpose.msra.mxu0 0
  %1310 = vmatprep.subr.bf16.mxu0 0
  %1311 = vmatpush1.bf16.xpose.msra.mxu0 0
  %1312 = vmatprep.subr.bf16.mxu0 0
  %1313 = vmatpush1.bf16.xpose.msra.mxu0 0
  %1314 = vmatprep.subr.bf16.mxu0 0
  %1315 = vmatpush1.bf16.xpose.msra.mxu0 0
  %1316 = vmatprep.subr.bf16.mxu0 0
  %1317 = vmatpush1.bf16.xpose.msra.mxu0 0
  %1318 = vmatprep.subr.bf16.mxu0 0
  %1319 = vmatpush1.bf16.xpose.msra.mxu0 0
  %1320 = vmatprep.mubr.bf16.mxu0 0
  %1321 = vmatmul.mubr.bf16.gmra.mrb[0].mxu0 %v1283
  %v1322 = vpop.f32.mrb[0].mxu0
  %v1323 = vadd.f32 %v212, %v1322
  %v1324 = vpop.f32.mrb[0].mxu0
  %v1325 = vpop.f32.mrb[0].mxu0
  %v1326 = vadd.f32 %v213, %v1325
  %v1327 = vpop.f32.mrb[0].mxu0
  %1328 = vdwg.mxu0
  %v1329 = vsel %vm332, %v1323, -inf
  %1330 = vmax.xlane.f32.xlu0 %v1329
  %v1331 = vpop.xlane.xlu0 %1330
  %v1332 = vsel %vm332, %v1326, -inf
  %1333 = vmax.xlane.f32.xlu0 %v1332
  %v1334 = vpop.xlane.xlu0 %1333
  %v1335 = vsub.f32 %v1323, %v1331
  %v1336 = vsub.f32 %v1326, %v1334
  %v1337 = vmul.f32 %v1335, 1.442695
  %v1338 = vpow.pop %v1337
  %v1339 = vmul.f32 %v1336, 1.442695
  %v1340 = vpow.pop %v1339
  %v1341 = vsel %vm332, %v1338, 0.0
  %1342 = vadd.xlane.f32.xlu0 %v1341
  %v1343 = vpop.xlane.xlu0 %1342
  %v1344 = vsel %vm332, %v1340, 0.0
  %1345 = vadd.xlane.f32.xlu0 %v1344
  %v1346 = vpop.xlane.xlu0 %1345
  %v1347 = vrcp.pop %v1343
  %v1348 = vrcp.pop %v1346
  %v1349 = vmul.f32 %v1338, %v1347
  %v1350 = vmul.f32 %v1340, %v1348
  %v1351 = vpack.c.bf16 %v1350, %v1349
  %1352 = vrot.lane.b32.xlu0 %v1157, 56
  %v1353 = vpop.permute.xlu0 %1352
  %v1356 = vsel %vm332, %v1351, 0
  %1358 = vmatprep.subr.bf16.mxu0 0
  %1359 = vmatpush1.bf16.msra.mxu0 %v1353
  %1360 = vmatprep.subr.bf16.mxu0 0
  %1361 = vmatpush1.bf16.msra.mxu0 0
  %1362 = vmatprep.subr.bf16.mxu0 0
  %1363 = vmatpush1.bf16.msra.mxu0 0
  %1364 = vmatprep.subr.bf16.mxu0 0
  %1365 = vmatpush1.bf16.msra.mxu0 0
  %1366 = vmatprep.subr.bf16.mxu0 0
  %1367 = vmatpush1.bf16.msra.mxu0 0
  %1368 = vmatprep.subr.bf16.mxu0 0
  %1369 = vmatpush1.bf16.msra.mxu0 0
  %1370 = vmatprep.subr.bf16.mxu0 0
  %1371 = vmatpush1.bf16.msra.mxu0 0
  %1372 = vmatprep.subr.bf16.mxu0 0
  %1373 = vmatpush1.bf16.msra.mxu0 0
  %1374 = vmatprep.subr.bf16.mxu0 0
  %1375 = vmatpush1.bf16.msra.mxu0 0
  %1376 = vmatprep.subr.bf16.mxu0 0
  %1377 = vmatpush1.bf16.msra.mxu0 0
  %1378 = vmatprep.subr.bf16.mxu0 0
  %1379 = vmatpush1.bf16.msra.mxu0 0
  %1380 = vmatprep.subr.bf16.mxu0 0
  %1381 = vmatpush1.bf16.msra.mxu0 0
  %1382 = vmatprep.subr.bf16.mxu0 0
  %1383 = vmatpush1.bf16.msra.mxu0 0
  %1384 = vmatprep.subr.bf16.mxu0 0
  %1385 = vmatpush1.bf16.msra.mxu0 0
  %1386 = vmatprep.subr.bf16.mxu0 0
  %1387 = vmatpush1.bf16.msra.mxu0 0
  %1388 = vmatprep.subr.bf16.mxu0 0
  %1389 = vmatpush1.bf16.msra.mxu0 0
  %1390 = vmatprep.mubr.bf16.mxu0 0
  %1391 = vmatmul.mubr.bf16.gmra.mrb[0].mxu0 %v1356
  %v1392 = vpop.f32.mrb[0].mxu0
  %v1393 = vadd.f32 0.0, %v1392
  %v1394 = vpop.f32.mrb[0].mxu0
  %v1395 = vpop.f32.mrb[0].mxu0
  %v1396 = vadd.f32 0.0, %v1395
  %v1397 = vpop.f32.mrb[0].mxu0
  %1398 = vdwg.mxu0
  %1399 = vrot.lane.b32.xlu0 %v1157, 112
  %v1400 = vpop.permute.xlu0 %1399
  %1401 = vrot.lane.b32.xlu0 %v1157, 80
  %v1402 = vpop.permute.xlu0 %1401
  %v1404 = vsel %vm284, %v1400, 0
  %v1407 = vsel %vm284, %v1402, 0
  %1409 = vmatprep.subr.bf16.mxu0 0
  %1410 = vmatpush1.bf16.xpose.msra.mxu0 %v1407
  %1411 = vmatprep.subr.bf16.mxu0 0
  %1412 = vmatpush1.bf16.xpose.msra.mxu0 0
  %1413 = vmatprep.subr.bf16.mxu0 0
  %1414 = vmatpush1.bf16.xpose.msra.mxu0 0
  %1415 = vmatprep.subr.bf16.mxu0 0
  %1416 = vmatpush1.bf16.xpose.msra.mxu0 0
  %1417 = vmatprep.subr.bf16.mxu0 0
  %1418 = vmatpush1.bf16.xpose.msra.mxu0 0
  %1419 = vmatprep.subr.bf16.mxu0 0
  %1420 = vmatpush1.bf16.xpose.msra.mxu0 0
  %1421 = vmatprep.subr.bf16.mxu0 0
  %1422 = vmatpush1.bf16.xpose.msra.mxu0 0
  %1423 = vmatprep.subr.bf16.mxu0 0
  %1424 = vmatpush1.bf16.xpose.msra.mxu0 0
  %1425 = vmatprep.subr.bf16.mxu0 0
  %1426 = vmatpush1.bf16.xpose.msra.mxu0 0
  %1427 = vmatprep.subr.bf16.mxu0 0
  %1428 = vmatpush1.bf16.xpose.msra.mxu0 0
  %1429 = vmatprep.subr.bf16.mxu0 0
  %1430 = vmatpush1.bf16.xpose.msra.mxu0 0
  %1431 = vmatprep.subr.bf16.mxu0 0
  %1432 = vmatpush1.bf16.xpose.msra.mxu0 0
  %1433 = vmatprep.subr.bf16.mxu0 0
  %1434 = vmatpush1.bf16.xpose.msra.mxu0 0
  %1435 = vmatprep.subr.bf16.mxu0 0
  %1436 = vmatpush1.bf16.xpose.msra.mxu0 0
  %1437 = vmatprep.subr.bf16.mxu0 0
  %1438 = vmatpush1.bf16.xpose.msra.mxu0 0
  %1439 = vmatprep.subr.bf16.mxu0 0
  %1440 = vmatpush1.bf16.xpose.msra.mxu0 0
  %1441 = vmatprep.mubr.bf16.mxu0 0
  %1442 = vmatmul.mubr.bf16.gmra.mrb[0].mxu0 %v1404
  %v1443 = vpop.f32.mrb[0].mxu0
  %v1444 = vadd.f32 %v212, %v1443
  %v1445 = vpop.f32.mrb[0].mxu0
  %v1446 = vpop.f32.mrb[0].mxu0
  %v1447 = vadd.f32 %v213, %v1446
  %v1448 = vpop.f32.mrb[0].mxu0
  %1449 = vdwg.mxu0
  %v1450 = vsel %vm332, %v1444, -inf
  %1451 = vmax.xlane.f32.xlu0 %v1450
  %v1452 = vpop.xlane.xlu0 %1451
  %v1453 = vsel %vm332, %v1447, -inf
  %1454 = vmax.xlane.f32.xlu0 %v1453
  %v1455 = vpop.xlane.xlu0 %1454
  %v1456 = vsub.f32 %v1444, %v1452
  %v1457 = vsub.f32 %v1447, %v1455
  %v1458 = vmul.f32 %v1456, 1.442695
  %v1459 = vpow.pop %v1458
  %v1460 = vmul.f32 %v1457, 1.442695
  %v1461 = vpow.pop %v1460
  %v1462 = vsel %vm332, %v1459, 0.0
  %1463 = vadd.xlane.f32.xlu0 %v1462
  %v1464 = vpop.xlane.xlu0 %1463
  %v1465 = vsel %vm332, %v1461, 0.0
  %1466 = vadd.xlane.f32.xlu0 %v1465
  %v1467 = vpop.xlane.xlu0 %1466
  %v1468 = vrcp.pop %v1464
  %v1469 = vrcp.pop %v1467
  %v1470 = vmul.f32 %v1459, %v1468
  %v1471 = vmul.f32 %v1461, %v1469
  %v1472 = vpack.c.bf16 %v1471, %v1470
  %1473 = vrot.lane.b32.xlu0 %v1157, 48
  %v1474 = vpop.permute.xlu0 %1473
  %v1477 = vsel %vm332, %v1472, 0
  %1479 = vmatprep.subr.bf16.mxu0 0
  %1480 = vmatpush1.bf16.msra.mxu0 %v1474
  %1481 = vmatprep.subr.bf16.mxu0 0
  %1482 = vmatpush1.bf16.msra.mxu0 0
  %1483 = vmatprep.subr.bf16.mxu0 0
  %1484 = vmatpush1.bf16.msra.mxu0 0
  %1485 = vmatprep.subr.bf16.mxu0 0
  %1486 = vmatpush1.bf16.msra.mxu0 0
  %1487 = vmatprep.subr.bf16.mxu0 0
  %1488 = vmatpush1.bf16.msra.mxu0 0
  %1489 = vmatprep.subr.bf16.mxu0 0
  %1490 = vmatpush1.bf16.msra.mxu0 0
  %1491 = vmatprep.subr.bf16.mxu0 0
  %1492 = vmatpush1.bf16.msra.mxu0 0
  %1493 = vmatprep.subr.bf16.mxu0 0
  %1494 = vmatpush1.bf16.msra.mxu0 0
  %1495 = vmatprep.subr.bf16.mxu0 0
  %1496 = vmatpush1.bf16.msra.mxu0 0
  %1497 = vmatprep.subr.bf16.mxu0 0
  %1498 = vmatpush1.bf16.msra.mxu0 0
  %1499 = vmatprep.subr.bf16.mxu0 0
  %1500 = vmatpush1.bf16.msra.mxu0 0
  %1501 = vmatprep.subr.bf16.mxu0 0
  %1502 = vmatpush1.bf16.msra.mxu0 0
  %1503 = vmatprep.subr.bf16.mxu0 0
  %1504 = vmatpush1.bf16.msra.mxu0 0
  %1505 = vmatprep.subr.bf16.mxu0 0
  %1506 = vmatpush1.bf16.msra.mxu0 0
  %1507 = vmatprep.subr.bf16.mxu0 0
  %1508 = vmatpush1.bf16.msra.mxu0 0
  %1509 = vmatprep.subr.bf16.mxu0 0
  %1510 = vmatpush1.bf16.msra.mxu0 0
  %1511 = vmatprep.mubr.bf16.mxu0 0
  %1512 = vmatmul.mubr.bf16.gmra.mrb[0].mxu0 %v1477
  %v1513 = vpop.f32.mrb[0].mxu0
  %v1514 = vadd.f32 0.0, %v1513
  %v1515 = vpop.f32.mrb[0].mxu0
  %v1516 = vpop.f32.mrb[0].mxu0
  %v1517 = vadd.f32 0.0, %v1516
  %v1518 = vpop.f32.mrb[0].mxu0
  %1519 = vdwg.mxu0
  %1520 = vrot.lane.b32.xlu0 %v1157, 104
  %v1521 = vpop.permute.xlu0 %1520
  %1522 = vrot.lane.b32.xlu0 %v1157, 72
  %v1523 = vpop.permute.xlu0 %1522
  %v1525 = vsel %vm284, %v1521, 0
  %v1528 = vsel %vm284, %v1523, 0
  %1530 = vmatprep.subr.bf16.mxu0 0
  %1531 = vmatpush1.bf16.xpose.msra.mxu0 %v1528
  %1532 = vmatprep.subr.bf16.mxu0 0
  %1533 = vmatpush1.bf16.xpose.msra.mxu0 0
  %1534 = vmatprep.subr.bf16.mxu0 0
  %1535 = vmatpush1.bf16.xpose.msra.mxu0 0
  %1536 = vmatprep.subr.bf16.mxu0 0
  %1537 = vmatpush1.bf16.xpose.msra.mxu0 0
  %1538 = vmatprep.subr.bf16.mxu0 0
  %1539 = vmatpush1.bf16.xpose.msra.mxu0 0
  %1540 = vmatprep.subr.bf16.mxu0 0
  %1541 = vmatpush1.bf16.xpose.msra.mxu0 0
  %1542 = vmatprep.subr.bf16.mxu0 0
  %1543 = vmatpush1.bf16.xpose.msra.mxu0 0
  %1544 = vmatprep.subr.bf16.mxu0 0
  %1545 = vmatpush1.bf16.xpose.msra.mxu0 0
  %1546 = vmatprep.subr.bf16.mxu0 0
  %1547 = vmatpush1.bf16.xpose.msra.mxu0 0
  %1548 = vmatprep.subr.bf16.mxu0 0
  %1549 = vmatpush1.bf16.xpose.msra.mxu0 0
  %1550 = vmatprep.subr.bf16.mxu0 0
  %1551 = vmatpush1.bf16.xpose.msra.mxu0 0
  %1552 = vmatprep.subr.bf16.mxu0 0
  %1553 = vmatpush1.bf16.xpose.msra.mxu0 0
  %1554 = vmatprep.subr.bf16.mxu0 0
  %1555 = vmatpush1.bf16.xpose.msra.mxu0 0
  %1556 = vmatprep.subr.bf16.mxu0 0
  %1557 = vmatpush1.bf16.xpose.msra.mxu0 0
  %1558 = vmatprep.subr.bf16.mxu0 0
  %1559 = vmatpush1.bf16.xpose.msra.mxu0 0
  %1560 = vmatprep.subr.bf16.mxu0 0
  %1561 = vmatpush1.bf16.xpose.msra.mxu0 0
  %1562 = vmatprep.mubr.bf16.mxu0 0
  %1563 = vmatmul.mubr.bf16.gmra.mrb[0].mxu0 %v1525
  %v1564 = vpop.f32.mrb[0].mxu0
  %v1565 = vadd.f32 %v212, %v1564
  %v1566 = vpop.f32.mrb[0].mxu0
  %v1567 = vpop.f32.mrb[0].mxu0
  %v1568 = vadd.f32 %v213, %v1567
  %v1569 = vpop.f32.mrb[0].mxu0
  %1570 = vdwg.mxu0
  %v1571 = vsel %vm332, %v1565, -inf
  %1572 = vmax.xlane.f32.xlu0 %v1571
  %v1573 = vpop.xlane.xlu0 %1572
  %v1574 = vsel %vm332, %v1568, -inf
  %1575 = vmax.xlane.f32.xlu0 %v1574
  %v1576 = vpop.xlane.xlu0 %1575
  %v1577 = vsub.f32 %v1565, %v1573
  %v1578 = vsub.f32 %v1568, %v1576
  %v1579 = vmul.f32 %v1577, 1.442695
  %v1580 = vpow.pop %v1579
  %v1581 = vmul.f32 %v1578, 1.442695
  %v1582 = vpow.pop %v1581
  %v1583 = vsel %vm332, %v1580, 0.0
  %1584 = vadd.xlane.f32.xlu0 %v1583
  %v1585 = vpop.xlane.xlu0 %1584
  %v1586 = vsel %vm332, %v1582, 0.0
  %1587 = vadd.xlane.f32.xlu0 %v1586
  %v1588 = vpop.xlane.xlu0 %1587
  %v1589 = vrcp.pop %v1585
  %v1590 = vrcp.pop %v1588
  %v1591 = vmul.f32 %v1580, %v1589
  %v1592 = vmul.f32 %v1582, %v1590
  %v1593 = vpack.c.bf16 %v1592, %v1591
  %1594 = vrot.lane.b32.xlu0 %v1157, 40
  %v1595 = vpop.permute.xlu0 %1594
  %v1598 = vsel %vm332, %v1593, 0
  %1600 = vmatprep.subr.bf16.mxu0 0
  %1601 = vmatpush1.bf16.msra.mxu0 %v1595
  %1602 = vmatprep.subr.bf16.mxu0 0
  %1603 = vmatpush1.bf16.msra.mxu0 0
  %1604 = vmatprep.subr.bf16.mxu0 0
  %1605 = vmatpush1.bf16.msra.mxu0 0
  %1606 = vmatprep.subr.bf16.mxu0 0
  %1607 = vmatpush1.bf16.msra.mxu0 0
  %1608 = vmatprep.subr.bf16.mxu0 0
  %1609 = vmatpush1.bf16.msra.mxu0 0
  %1610 = vmatprep.subr.bf16.mxu0 0
  %1611 = vmatpush1.bf16.msra.mxu0 0
  %1612 = vmatprep.subr.bf16.mxu0 0
  %1613 = vmatpush1.bf16.msra.mxu0 0
  %1614 = vmatprep.subr.bf16.mxu0 0
  %1615 = vmatpush1.bf16.msra.mxu0 0
  %1616 = vmatprep.subr.bf16.mxu0 0
  %1617 = vmatpush1.bf16.msra.mxu0 0
  %1618 = vmatprep.subr.bf16.mxu0 0
  %1619 = vmatpush1.bf16.msra.mxu0 0
  %1620 = vmatprep.subr.bf16.mxu0 0
  %1621 = vmatpush1.bf16.msra.mxu0 0
  %1622 = vmatprep.subr.bf16.mxu0 0
  %1623 = vmatpush1.bf16.msra.mxu0 0
  %1624 = vmatprep.subr.bf16.mxu0 0
  %1625 = vmatpush1.bf16.msra.mxu0 0
  %1626 = vmatprep.subr.bf16.mxu0 0
  %1627 = vmatpush1.bf16.msra.mxu0 0
  %1628 = vmatprep.subr.bf16.mxu0 0
  %1629 = vmatpush1.bf16.msra.mxu0 0
  %1630 = vmatprep.subr.bf16.mxu0 0
  %1631 = vmatpush1.bf16.msra.mxu0 0
  %1632 = vmatprep.mubr.bf16.mxu0 0
  %1633 = vmatmul.mubr.bf16.gmra.mrb[0].mxu0 %v1598
  %v1634 = vpop.f32.mrb[0].mxu0
  %v1635 = vadd.f32 0.0, %v1634
  %v1636 = vpop.f32.mrb[0].mxu0
  %v1637 = vpop.f32.mrb[0].mxu0
  %v1638 = vadd.f32 0.0, %v1637
  %v1639 = vpop.f32.mrb[0].mxu0
  %1640 = vdwg.mxu0
  %1643 = vrot.lane.b32.xlu0 %v1393, 8
  %v1644 = vpop.permute.xlu0 %1643
  %1645 = vrot.lane.b32.xlu0 %v1396, 8
  %v1646 = vpop.permute.xlu0 %1645
  %1651 = vrot.lane.b32.xlu0 %v1514, 16
  %v1652 = vpop.permute.xlu0 %1651
  %1653 = vrot.lane.b32.xlu0 %v1517, 16
  %v1654 = vpop.permute.xlu0 %1653
  %1659 = vrot.lane.b32.xlu0 %v1635, 24
  %v1660 = vpop.permute.xlu0 %1659
  %1661 = vrot.lane.b32.xlu0 %v1638, 24
  %v1662 = vpop.permute.xlu0 %1661
  %v1665 = vsel %vm284, %v1272, %v1644
  %v1666 = vsel %vm284, %v1275, %v1646
  %v1667 = vsel %vm332, %v1665, %v1652
  %v1668 = vsel %vm332, %v1666, %v1654
  %v1669 = vsel %vm794, %v1667, %v1660
  %v1670 = vsel %vm794, %v1668, %v1662
  %v1671 = vpack.c.bf16 %v1670, %v1669
  %v1672 = vlaneseq
  %v1673 = vshrl.u32 %v1672, 7
  %v1674 = vsub.s32 1, %v1673
  %v1675 = vrot.slane %v1095, %v1674
  %1676 = vrot.lane.b32.xlu0 %v1109, 32
  %v1677 = vpop.permute.xlu0 %1676
  %1678 = vrot.lane.b32.xlu0 %v1110, 32
  %v1679 = vpop.permute.xlu0 %1678
  %v1683 = vsel %vm172, %v1671, 0
  %1685 = vmatprep.subr.bf16.mxu0 0
  %1686 = vmatpush1.bf16.msra.mxu0 %v1677
  %1687 = vmatprep.subr.bf16.mxu0 0
  %1688 = vmatpush1.bf16.msra.mxu0 %v1679
  %1689 = vmatprep.subr.bf16.mxu0 0
  %1690 = vmatpush1.bf16.msra.mxu0 0
  %1691 = vmatprep.subr.bf16.mxu0 0
  %1692 = vmatpush1.bf16.msra.mxu0 0
  %1693 = vmatprep.subr.bf16.mxu0 0
  %1694 = vmatpush1.bf16.msra.mxu0 0
  %1695 = vmatprep.subr.bf16.mxu0 0
  %1696 = vmatpush1.bf16.msra.mxu0 0
  %1697 = vmatprep.subr.bf16.mxu0 0
  %1698 = vmatpush1.bf16.msra.mxu0 0
  %1699 = vmatprep.subr.bf16.mxu0 0
  %1700 = vmatpush1.bf16.msra.mxu0 0
  %1701 = vmatprep.subr.bf16.mxu0 0
  %1702 = vmatpush1.bf16.msra.mxu0 0
  %1703 = vmatprep.subr.bf16.mxu0 0
  %1704 = vmatpush1.bf16.msra.mxu0 0
  %1705 = vmatprep.subr.bf16.mxu0 0
  %1706 = vmatpush1.bf16.msra.mxu0 0
  %1707 = vmatprep.subr.bf16.mxu0 0
  %1708 = vmatpush1.bf16.msra.mxu0 0
  %1709 = vmatprep.subr.bf16.mxu0 0
  %1710 = vmatpush1.bf16.msra.mxu0 0
  %1711 = vmatprep.subr.bf16.mxu0 0
  %1712 = vmatpush1.bf16.msra.mxu0 0
  %1713 = vmatprep.subr.bf16.mxu0 0
  %1714 = vmatpush1.bf16.msra.mxu0 0
  %1715 = vmatprep.subr.bf16.mxu0 0
  %1716 = vmatpush1.bf16.msra.mxu0 0
  %1717 = vmatprep.mubr.bf16.mxu0 0
  %1718 = vmatmul.mubr.bf16.gmra.mrb[0].mxu0 %v1683
  %v1719 = vpop.f32.mrb[0].mxu0
  %v1720 = vadd.f32 %v1675, %v1719
  %v1721 = vpop.f32.mrb[0].mxu0
  %v1722 = vpop.f32.mrb[0].mxu0
  %v1723 = vadd.f32 %v1675, %v1722
  %v1724 = vpop.f32.mrb[0].mxu0
  %1725 = vdwg.mxu0
  %v1726 = vadd.f32 %v1720, %v1087
  %v1727 = vadd.f32 %v1723, %v1088
  %v1728 = vsel %vm172, %v1726, 0.0
  %1729 = vadd.xlane.f32.xlu0 %v1728
  %v1730 = vpop.xlane.xlu0 %1729
  %v1731 = vsel %vm172, %v1727, 0.0
  %1732 = vadd.xlane.f32.xlu0 %v1731
  %v1733 = vpop.xlane.xlu0 %1732
  %v1734 = vmul.f32 %v1730, %v179
  %v1735 = vmul.f32 %v1733, %v179
  %v1736 = vsub.f32 %v1726, %v1734
  %v1737 = vsub.f32 %v1727, %v1735
  %v1738 = vmul.f32 %v1736, %v1736
  %v1739 = vmul.f32 %v1737, %v1737
  %v1740 = vsel %vm172, %v1738, 0.0
  %1741 = vadd.xlane.f32.xlu0 %v1740
  %v1742 = vpop.xlane.xlu0 %1741
  %v1743 = vsel %vm172, %v1739, 0.0
  %1744 = vadd.xlane.f32.xlu0 %v1743
  %v1745 = vpop.xlane.xlu0 %1744
  %v1746 = vmul.f32 %v1742, %v179
  %v1747 = vmul.f32 %v1745, %v179
  %v1748 = vadd.f32 %v1746, 1e-05
  %v1749 = vadd.f32 %v1747, 1e-05
  %v1750 = vrsqrt.pop %v1748
  %v1751 = vrsqrt.pop %v1749
  %v1752 = vmul.f32 %v1736, %v1750
  %v1753 = vmul.f32 %v1737, %v1751
  %v1754 = vlaneseq
  %v1755 = vshrl.u32 %v1754, 7
  %v1756 = vsub.s32 2, %v1755
  %v1757 = vrot.slane %v1095, %v1756
  %v1758 = vmul.f32 %v1752, %v1757
  %v1759 = vmul.f32 %v1753, %v1757
  %v1760 = vlaneseq
  %v1761 = vshrl.u32 %v1760, 7
  %v1762 = vsub.s32 3, %v1761
  %v1763 = vrot.slane %v1095, %v1762
  %v1764 = vadd.f32 %v1758, %v1763
  %v1765 = vadd.f32 %v1759, %v1763
  %v1766 = vpack.c.bf16 %v1765, %v1764
  %v1767 = vlaneseq
  %v1768 = vshrl.u32 %v1767, 7
  %v1769 = vsub.s32 4, %v1768
  %v1770 = vrot.slane %v1095, %v1769
  %v1771 = vunpack.c.h.b16 %v1090
  %v1772 = vunpack.c.h.b16 %v1091
  %v1773 = vunpack.c.h.b16 %v1092
  %v1774 = vunpack.c.h.b16 %v1093
  %v1775 = vpack.c.b16 %v1772, %v1771
  %v1776 = vpack.c.b16 %v1774, %v1773
  %v1780 = vsel %vm172, %v1766, 0
  %1782 = vmatprep.subr.bf16.mxu0 0
  %1783 = vmatpush1.bf16.msra.mxu0 %v1775
  %1784 = vmatprep.subr.bf16.mxu0 0
  %1785 = vmatpush1.bf16.msra.mxu0 %v1776
  %1786 = vmatprep.subr.bf16.mxu0 0
  %1787 = vmatpush1.bf16.msra.mxu0 0
  %1788 = vmatprep.subr.bf16.mxu0 0
  %1789 = vmatpush1.bf16.msra.mxu0 0
  %1790 = vmatprep.subr.bf16.mxu0 0
  %1791 = vmatpush1.bf16.msra.mxu0 0
  %1792 = vmatprep.subr.bf16.mxu0 0
  %1793 = vmatpush1.bf16.msra.mxu0 0
  %1794 = vmatprep.subr.bf16.mxu0 0
  %1795 = vmatpush1.bf16.msra.mxu0 0
  %1796 = vmatprep.subr.bf16.mxu0 0
  %1797 = vmatpush1.bf16.msra.mxu0 0
  %1798 = vmatprep.subr.bf16.mxu0 0
  %1799 = vmatpush1.bf16.msra.mxu0 0
  %1800 = vmatprep.subr.bf16.mxu0 0
  %1801 = vmatpush1.bf16.msra.mxu0 0
  %1802 = vmatprep.subr.bf16.mxu0 0
  %1803 = vmatpush1.bf16.msra.mxu0 0
  %1804 = vmatprep.subr.bf16.mxu0 0
  %1805 = vmatpush1.bf16.msra.mxu0 0
  %1806 = vmatprep.subr.bf16.mxu0 0
  %1807 = vmatpush1.bf16.msra.mxu0 0
  %1808 = vmatprep.subr.bf16.mxu0 0
  %1809 = vmatpush1.bf16.msra.mxu0 0
  %1810 = vmatprep.subr.bf16.mxu0 0
  %1811 = vmatpush1.bf16.msra.mxu0 0
  %1812 = vmatprep.subr.bf16.mxu0 0
  %1813 = vmatpush1.bf16.msra.mxu0 0
  %1814 = vmatprep.mubr.bf16.mxu0 0
  %1815 = vmatmul.mubr.bf16.gmra.mrb[0].mxu0 %v1780
  %v1816 = vpop.f32.mrb[0].mxu0
  %v1817 = vadd.f32 %v1770, %v1816
  %v1818 = vpop.f32.mrb[0].mxu0
  %v1819 = vpop.f32.mrb[0].mxu0
  %v1820 = vadd.f32 %v1770, %v1819
  %v1821 = vpop.f32.mrb[0].mxu0
  %1822 = vdwg.mxu0
  %v1823 = vmul.f32 %v1817, 0.5
  %v1824 = vmul.f32 %v1820, 0.5
  %v1825 = vmul.f32 %v1817, 0.044715
  %v1826 = vmul.f32 %v1820, 0.044715
  %v1827 = vmul.f32 %v1825, %v1817
  %v1828 = vmul.f32 %v1826, %v1820
  %v1829 = vmul.f32 %v1827, %v1817
  %v1830 = vmul.f32 %v1828, %v1820
  %v1831 = vadd.f32 %v1817, %v1829
  %v1832 = vadd.f32 %v1820, %v1830
  %v1833 = vmul.f32 %v1831, 0.7978846
  %v1834 = vmul.f32 %v1832, 0.7978846
  %v1835 = vtanh.pop %v1833
  %v1836 = vtanh.pop %v1834
  %v1837 = vadd.f32 %v1835, 1.0
  %v1838 = vadd.f32 %v1836, 1.0
  %v1839 = vmul.f32 %v1823, %v1837
  %v1840 = vmul.f32 %v1824, %v1838
  %s1841 = scalar_lea.vmem %s5, 32
  %v1842 = vld [vmem:[%s1841] sm:$0xf]
  %v1843 = vld [vmem:[%s1841 + $0x4] sm:$0xf]
  %v1844 = vld [vmem:[%s1841 + $0x8] sm:$0xf]
  %v1845 = vld [vmem:[%s1841 + $0xc] sm:$0xf]
  %v1846 = vld [vmem:[%s1841 + $0x10] sm:$0xf]
  %v1847 = vld [vmem:[%s1841 + $0x14] sm:$0xf]
  %v1848 = vld [vmem:[%s1841 + $0x18] sm:$0xf]
  %v1849 = vld [vmem:[%s1841 + $0x1c] sm:$0xf]
  %v1850 = vpack.c.bf16 %v1840, %v1839
  %v1851 = vlaneseq
  %v1852 = vshrl.u32 %v1851, 7
  %v1853 = vsub.s32 5, %v1852
  %v1854 = vrot.slane %v1095, %v1853
  %v1863 = vunpack.c.l.b16 %v1842
  %v1864 = vunpack.c.l.b16 %v1843
  %v1865 = vunpack.c.l.b16 %v1844
  %v1866 = vunpack.c.l.b16 %v1845
  %v1867 = vunpack.c.l.b16 %v1846
  %v1868 = vunpack.c.l.b16 %v1847
  %v1869 = vunpack.c.l.b16 %v1848
  %v1870 = vunpack.c.l.b16 %v1849
  %v1871 = vpack.c.b16 %v1864, %v1863
  %v1872 = vpack.c.b16 %v1866, %v1865
  %v1873 = vpack.c.b16 %v1868, %v1867
  %v1874 = vpack.c.b16 %v1870, %v1869
  %v1880 = vsel %vm1004, %v1850, 0
  %1882 = vmatprep.subr.bf16.mxu0 0
  %1883 = vmatpush1.bf16.msra.mxu0 %v1871
  %1884 = vmatprep.subr.bf16.mxu0 0
  %1885 = vmatpush1.bf16.msra.mxu0 %v1872
  %1886 = vmatprep.subr.bf16.mxu0 0
  %1887 = vmatpush1.bf16.msra.mxu0 %v1873
  %1888 = vmatprep.subr.bf16.mxu0 0
  %1889 = vmatpush1.bf16.msra.mxu0 %v1874
  %1890 = vmatprep.subr.bf16.mxu0 0
  %1891 = vmatpush1.bf16.msra.mxu0 0
  %1892 = vmatprep.subr.bf16.mxu0 0
  %1893 = vmatpush1.bf16.msra.mxu0 0
  %1894 = vmatprep.subr.bf16.mxu0 0
  %1895 = vmatpush1.bf16.msra.mxu0 0
  %1896 = vmatprep.subr.bf16.mxu0 0
  %1897 = vmatpush1.bf16.msra.mxu0 0
  %1898 = vmatprep.subr.bf16.mxu0 0
  %1899 = vmatpush1.bf16.msra.mxu0 0
  %1900 = vmatprep.subr.bf16.mxu0 0
  %1901 = vmatpush1.bf16.msra.mxu0 0
  %1902 = vmatprep.subr.bf16.mxu0 0
  %1903 = vmatpush1.bf16.msra.mxu0 0
  %1904 = vmatprep.subr.bf16.mxu0 0
  %1905 = vmatpush1.bf16.msra.mxu0 0
  %1906 = vmatprep.subr.bf16.mxu0 0
  %1907 = vmatpush1.bf16.msra.mxu0 0
  %1908 = vmatprep.subr.bf16.mxu0 0
  %1909 = vmatpush1.bf16.msra.mxu0 0
  %1910 = vmatprep.subr.bf16.mxu0 0
  %1911 = vmatpush1.bf16.msra.mxu0 0
  %1912 = vmatprep.subr.bf16.mxu0 0
  %1913 = vmatpush1.bf16.msra.mxu0 0
  %1914 = vmatprep.mubr.bf16.mxu0 0
  %1915 = vmatmul.mubr.bf16.gmra.mrb[0].mxu0 %v1880
  %v1916 = vpop.f32.mrb[0].mxu0
  %v1917 = vadd.f32 %v1854, %v1916
  %v1918 = vpop.f32.mrb[0].mxu0
  %v1919 = vpop.f32.mrb[0].mxu0
  %v1920 = vadd.f32 %v1854, %v1919
  %v1921 = vpop.f32.mrb[0].mxu0
  %1922 = vdwg.mxu0
  %v1923 = vadd.f32 %v1917, %v1764
  %v1924 = vadd.f32 %v1920, %v1765
  %v1925 = vsel %vm172, %v1923, 0.0
  %1926 = vadd.xlane.f32.xlu0 %v1925
  %v1927 = vpop.xlane.xlu0 %1926
  %v1928 = vsel %vm172, %v1924, 0.0
  %1929 = vadd.xlane.f32.xlu0 %v1928
  %v1930 = vpop.xlane.xlu0 %1929
  %v1931 = vmul.f32 %v1927, %v179
  %v1932 = vmul.f32 %v1930, %v179
  %v1933 = vsub.f32 %v1923, %v1931
  %v1934 = vsub.f32 %v1924, %v1932
  %v1935 = vmul.f32 %v1933, %v1933
  %v1936 = vmul.f32 %v1934, %v1934
  %v1937 = vsel %vm172, %v1935, 0.0
  %1938 = vadd.xlane.f32.xlu0 %v1937
  %v1939 = vpop.xlane.xlu0 %1938
  %v1940 = vsel %vm172, %v1936, 0.0
  %1941 = vadd.xlane.f32.xlu0 %v1940
  %v1942 = vpop.xlane.xlu0 %1941
  %v1943 = vmul.f32 %v1939, %v179
  %v1944 = vmul.f32 %v1942, %v179
  %v1945 = vadd.f32 %v1943, 1e-05
  %v1946 = vadd.f32 %v1944, 1e-05
  %v1947 = vrsqrt.pop %v1945
  %v1948 = vrsqrt.pop %v1946
  %v1949 = vmul.f32 %v1933, %v1947
  %v1950 = vmul.f32 %v1934, %v1948
  %v1951 = vlaneseq
  %v1952 = vshrl.u32 %v1951, 7
  %v1953 = vsub.s32 6, %v1952
  %v1954 = vrot.slane %v1095, %v1953
  %v1955 = vmul.f32 %v1949, %v1954
  %v1956 = vmul.f32 %v1950, %v1954
  %v1957 = vlaneseq
  %v1958 = vshrl.u32 %v1957, 7
  %v1959 = vsub.s32 7, %v1958
  %v1960 = vrot.slane %v1095, %v1959
  %v1961 = vadd.f32 %v1955, %v1960
  %v1962 = vadd.f32 %v1956, %v1960
  %v1963 = vld [vmem:[%s6] sm:$0xff]
  %v1964 = vld [vmem:[%s6 + $0x8] sm:$0xff]
  %v1965 = vld [vmem:[%s6 + $0x10] sm:$0xff]
  %v1966 = vld [vmem:[%s6 + $0x18] sm:$0xff]
  %v1967 = vpack.c.bf16 %v1962, %v1961
  %v1968 = vlaneseq
  %v1969 = vshrl.u32 %v1968, 7
  %v1970 = vsub.s32 2, %v1969
  %v1971 = vrot.slane %v78, %v1970
  %v1976 = vunpack.c.l.b16 %v1963
  %v1977 = vunpack.c.l.b16 %v1964
  %v1978 = vunpack.c.l.b16 %v1965
  %v1979 = vunpack.c.l.b16 %v1966
  %v1980 = vpack.c.b16 %v1977, %v1976
  %v1981 = vpack.c.b16 %v1979, %v1978
  %v1985 = vsel %vm172, %v1967, 0
  %1987 = vmatprep.subr.bf16.mxu0 0
  %1988 = vmatpush1.bf16.msra.mxu0 %v1980
  %1989 = vmatprep.subr.bf16.mxu0 0
  %1990 = vmatpush1.bf16.msra.mxu0 %v1981
  %1991 = vmatprep.subr.bf16.mxu0 0
  %1992 = vmatpush1.bf16.msra.mxu0 0
  %1993 = vmatprep.subr.bf16.mxu0 0
  %1994 = vmatpush1.bf16.msra.mxu0 0
  %1995 = vmatprep.subr.bf16.mxu0 0
  %1996 = vmatpush1.bf16.msra.mxu0 0
  %1997 = vmatprep.subr.bf16.mxu0 0
  %1998 = vmatpush1.bf16.msra.mxu0 0
  %1999 = vmatprep.subr.bf16.mxu0 0
  %2000 = vmatpush1.bf16.msra.mxu0 0
  %2001 = vmatprep.subr.bf16.mxu0 0
  %2002 = vmatpush1.bf16.msra.mxu0 0
  %2003 = vmatprep.subr.bf16.mxu0 0
  %2004 = vmatpush1.bf16.msra.mxu0 0
  %2005 = vmatprep.subr.bf16.mxu0 0
  %2006 = vmatpush1.bf16.msra.mxu0 0
  %2007 = vmatprep.subr.bf16.mxu0 0
  %2008 = vmatpush1.bf16.msra.mxu0 0
  %2009 = vmatprep.subr.bf16.mxu0 0
  %2010 = vmatpush1.bf16.msra.mxu0 0
  %2011 = vmatprep.subr.bf16.mxu0 0
  %2012 = vmatpush1.bf16.msra.mxu0 0
  %2013 = vmatprep.subr.bf16.mxu0 0
  %2014 = vmatpush1.bf16.msra.mxu0 0
  %2015 = vmatprep.subr.bf16.mxu0 0
  %2016 = vmatpush1.bf16.msra.mxu0 0
  %2017 = vmatprep.subr.bf16.mxu0 0
  %2018 = vmatpush1.bf16.msra.mxu0 0
  %2019 = vmatprep.mubr.bf16.mxu0 0
  %2020 = vmatmul.mubr.bf16.gmra.mrb[0].mxu0 %v1985
  %v2021 = vpop.f32.mrb[0].mxu0
  %v2022 = vadd.f32 %v1971, %v2021
  %v2023 = vpop.f32.mrb[0].mxu0
  %v2024 = vpop.f32.mrb[0].mxu0
  %v2025 = vadd.f32 %v1971, %v2024
  %v2026 = vpop.f32.mrb[0].mxu0
  %2027 = vdwg.mxu0
  %v2028 = vtanh.pop %v2022
  %v2029 = vtanh.pop %v2025
  %v2030 = vpack.c.bf16 %v2029, %v2028
  %v2031 = vlaneseq
  %v2032 = vshrl.u32 %v2031, 7
  %v2033 = vsub.s32 3, %v2032
  %v2034 = vrot.slane %v78, %v2033
  %v2035 = vunpack.c.h.b16 %v1963
  %v2036 = vunpack.c.h.b16 %v1964
  %v2037 = vunpack.c.h.b16 %v1965
  %v2038 = vunpack.c.h.b16 %v1966
  %v2039 = vpack.c.b16 %v2036, %v2035
  %v2040 = vpack.c.b16 %v2038, %v2037
  %2041 = vrot.lane.b32.xlu0 %v1980, 96
  %v2042 = vpop.permute.xlu0 %2041
  %2043 = vrot.lane.b32.xlu0 %v2039, 96
  %v2044 = vpop.permute.xlu0 %2043
  %2045 = vrot.lane.b32.xlu0 %v1981, 96
  %v2046 = vpop.permute.xlu0 %2045
  %2047 = vrot.lane.b32.xlu0 %v2040, 96
  %v2048 = vpop.permute.xlu0 %2047
  %vm2049 = vcmask 785408
  %v2050 = vsel %vm2049, %v2042, %v2044
  %v2051 = vsel %vm2049, %v2046, %v2048
  %v2055 = vsel %vm172, %v2030, 0
  %2057 = vmatprep.subr.bf16.mxu0 0
  %2058 = vmatpush1.bf16.msra.mxu0 %v2050
  %2059 = vmatprep.subr.bf16.mxu0 0
  %2060 = vmatpush1.bf16.msra.mxu0 %v2051
  %2061 = vmatprep.subr.bf16.mxu0 0
  %2062 = vmatpush1.bf16.msra.mxu0 0
  %2063 = vmatprep.subr.bf16.mxu0 0
  %2064 = vmatpush1.bf16.msra.mxu0 0
  %2065 = vmatprep.subr.bf16.mxu0 0
  %2066 = vmatpush1.bf16.msra.mxu0 0
  %2067 = vmatprep.subr.bf16.mxu0 0
  %2068 = vmatpush1.bf16.msra.mxu0 0
  %2069 = vmatprep.subr.bf16.mxu0 0
  %2070 = vmatpush1.bf16.msra.mxu0 0
  %2071 = vmatprep.subr.bf16.mxu0 0
  %2072 = vmatpush1.bf16.msra.mxu0 0
  %2073 = vmatprep.subr.bf16.mxu0 0
  %2074 = vmatpush1.bf16.msra.mxu0 0
  %2075 = vmatprep.subr.bf16.mxu0 0
  %2076 = vmatpush1.bf16.msra.mxu0 0
  %2077 = vmatprep.subr.bf16.mxu0 0
  %2078 = vmatpush1.bf16.msra.mxu0 0
  %2079 = vmatprep.subr.bf16.mxu0 0
  %2080 = vmatpush1.bf16.msra.mxu0 0
  %2081 = vmatprep.subr.bf16.mxu0 0
  %2082 = vmatpush1.bf16.msra.mxu0 0
  %2083 = vmatprep.subr.bf16.mxu0 0
  %2084 = vmatpush1.bf16.msra.mxu0 0
  %2085 = vmatprep.subr.bf16.mxu0 0
  %2086 = vmatpush1.bf16.msra.mxu0 0
  %2087 = vmatprep.subr.bf16.mxu0 0
  %2088 = vmatpush1.bf16.msra.mxu0 0
  %2089 = vmatprep.mubr.bf16.mxu0 0
  %2090 = vmatmul.mubr.bf16.gmra.mrb[0].mxu0 %v2055
  %v2091 = vpop.f32.mrb[0].mxu0
  %v2092 = vadd.f32 %v2034, %v2091
  %v2093 = vpop.f32.mrb[0].mxu0
  %v2094 = vpop.f32.mrb[0].mxu0
  %v2095 = vadd.f32 %v2034, %v2094
  %v2096 = vpop.f32.mrb[0].mxu0
  %2097 = vdwg.mxu0
  %2098 = vst [vmem:[%s9] sm:$0xff] %v2092
  %2099 = vst [vmem:[%s9 + $0x8] sm:$0xff] %v2095
  // Predicated region
  $region38: #{bert_class_forward.1} parent=0 // pred_check
    _
  $region39: #{bert_class_forward.1} parent=0 // pred_check_branch
    %2101 = sbr.rel (0) target = $region41
  $region40: #{bert_class_forward.1} parent=0 // pred_region
    _
  $region41: #{bert_class_forward.1} parent=0 // pred_fallthru
    _
  // Predicated region
  $region42: #{bert_class_forward.1} parent=0 // pred_check
    _
  $region43: #{bert_class_forward.1} parent=0 // pred_check_branch
    %2103 = sbr.rel (0) target = $region45
  $region44: #{bert_class_forward.1} parent=0 // pred_region
    _
  $region45: #{bert_class_forward.1} parent=0 // pred_fallthru
    _

</llo_original>
